<compile_context>
chip_gen: v7x
topology: tpu7x:2x2x1
jax: 0.10.0
libtpu: 0.0.40
codegen_flags: <defaults>
</compile_context>

<pallas_src>
import functools

import jax
import jax.numpy as jnp
from jax import lax
from jax.experimental import pallas as pl
from jax.experimental.pallas import tpu as pltpu


def _pick_tile(n, candidates):
    for c in candidates:
        if n % c == 0:
            return c
    return n


# ---------------------------------------------------------------------------
# Kernel 1: sequential LSTM recurrence, Tc timesteps per grid iteration.
# Inputs are pre-activations gx = x @ W_ih^T + b (computed in bulk outside),
# so each step does exactly one MXU matmul (h @ W_hh^T) + gate elementwise.
# ---------------------------------------------------------------------------
def _lstm_recurrence_kernel(gx_ref, h0_ref, c0_ref, whh_ref,
                            hall_ref, hn_ref, cn_ref,
                            h_s, c_s, *, hidden_dim, chunk):
    t = pl.program_id(0)

    @pl.when(t == 0)
    def _():
        h_s[...] = h0_ref[...]
        c_s[...] = c0_ref[...]

    H = hidden_dim
    whh = whh_ref[...]                       # (H, 4H), resident; hoisted load

    def step(s, carry):
        h, c = carry
        # gates layout matches PyTorch: [i, f, g, o] stacked along last dim (4H)
        gates = gx_ref[s] + jnp.dot(h, whh, preferred_element_type=jnp.float32)
        i_g = jax.nn.sigmoid(gates[:, 0:H])
        f_g = jax.nn.sigmoid(gates[:, H:2 * H])
        g_g = jnp.tanh(gates[:, 2 * H:3 * H])
        o_g = jax.nn.sigmoid(gates[:, 3 * H:4 * H])
        c_new = f_g * c + i_g * g_g
        h_new = o_g * jnp.tanh(c_new)
        hall_ref[s] = h_new                  # per-step hidden state (B, H)
        return (h_new, c_new)

    unroll = True if chunk <= 16 else 8
    h_fin, c_fin = lax.fori_loop(0, chunk, step, (h_s[...], c_s[...]),
                                 unroll=unroll)
    h_s[...] = h_fin
    c_s[...] = c_fin

    @pl.when(t == pl.num_programs(0) - 1)
    def _():
        hn_ref[...] = h_fin
        cn_ref[...] = c_fin


# ---------------------------------------------------------------------------
# Kernel 2: bulk vocab projection, tiled parallel-grid matmul:
#   logits(T*B, V) = H_all(T*B, H) @ W_lin^T(H, V) + b_lin
# ---------------------------------------------------------------------------
def _vocab_proj_kernel(h_ref, w_ref, b_ref, o_ref):
    o_ref[...] = (jnp.dot(h_ref[...], w_ref[...],
                          preferred_element_type=jnp.float32)
                  + b_ref[...])


def language_model_forward(x_idx, hidden, params, *, seq_chunk=None):
    """x_idx: (T, B) int32; hidden: (h0, c0) each (1, B, H). Returns (logits, (hn, cn))."""
    emb_tbl, w_ih, w_hh, b_ih, b_hh, w_lin, b_lin = params
    h0, c0 = hidden

    T, B = x_idx.shape
    V, E = emb_tbl.shape
    H = w_hh.shape[1]

    # ---- JAX glue: embedding gather + HOISTED bulk input projection --------
    x_emb = jnp.take(emb_tbl, x_idx, axis=0)                       # (T, B, E)
    w_ih_t = jnp.transpose(w_ih)                                   # (E, 4H)
    bias = (b_ih + b_hh).reshape(1, 1, 4 * H)
    gates_x = jnp.einsum('tbe,eg->tbg', x_emb, w_ih_t) + bias      # (T, B, 4H)

    w_hh_t = jnp.transpose(w_hh)                                   # (H, 4H)
    h0_2d = h0.reshape(B, H)
    c0_2d = c0.reshape(B, H)

    tc = seq_chunk if seq_chunk is not None else _pick_tile(T, (64, 32, 16, 8, 4, 2, 1))
    assert T % tc == 0, "sequence length must be divisible by the chunk size"

    kernel = functools.partial(_lstm_recurrence_kernel, hidden_dim=H, chunk=tc)

    rec_grid_spec = pltpu.PrefetchScalarGridSpec(
        num_scalar_prefetch=0,
        grid=(T // tc,),
        in_specs=[
            pl.BlockSpec((tc, B, 4 * H), lambda t: (t, 0, 0)),     # gates_x chunk
            pl.BlockSpec((B, H), lambda t: (0, 0)),                # h0
            pl.BlockSpec((B, H), lambda t: (0, 0)),                # c0
            pl.BlockSpec((H, 4 * H), lambda t: (0, 0)),            # W_hh^T (resident)
        ],
        out_specs=[
            pl.BlockSpec((tc, B, H), lambda t: (t, 0, 0)),         # h_all chunk
            pl.BlockSpec((B, H), lambda t: (0, 0)),                # h_n
            pl.BlockSpec((B, H), lambda t: (0, 0)),                # c_n
        ],
        scratch_shapes=[
            pltpu.VMEM((B, H), jnp.float32),                       # h carry
            pltpu.VMEM((B, H), jnp.float32),                       # c carry
        ],
    )

    h_all, hn, cn = pl.pallas_call(
        kernel,
        grid_spec=rec_grid_spec,
        out_shape=(
            jax.ShapeDtypeStruct((T, B, H), jnp.float32),
            jax.ShapeDtypeStruct((B, H), jnp.float32),
            jax.ShapeDtypeStruct((B, H), jnp.float32),
        ),
        compiler_params=pltpu.CompilerParams(
            dimension_semantics=("arbitrary",),                    # true recurrence over T
        ),
    )(gates_x, h0_2d, c0_2d, w_hh_t)

    # ---- HOISTED bulk vocab projection (parallel-grid Pallas matmul) -------
    h2d = h_all.reshape(T * B, H)
    w_lin_t = jnp.transpose(w_lin)                                 # (H, V)
    b_lin2 = b_lin.reshape(1, V)

    tm = _pick_tile(T * B, (256, 128, 64, 32, 16, 8, 4, 2, 1))
    tv = _pick_tile(V, (512, 256, 128, 64, 32, 16, 8, 4, 2, 1))

    proj_grid_spec = pltpu.PrefetchScalarGridSpec(
        num_scalar_prefetch=0,
        grid=(T * B // tm, V // tv),
        in_specs=[
            pl.BlockSpec((tm, H), lambda i, j: (i, 0)),
            pl.BlockSpec((H, tv), lambda i, j: (0, j)),
            pl.BlockSpec((1, tv), lambda i, j: (0, j)),
        ],
        out_specs=pl.BlockSpec((tm, tv), lambda i, j: (i, j)),
    )

    logits2d = pl.pallas_call(
        _vocab_proj_kernel,
        grid_spec=proj_grid_spec,
        out_shape=jax.ShapeDtypeStruct((T * B, V), jnp.float32),
        compiler_params=pltpu.CompilerParams(
            dimension_semantics=("parallel", "parallel"),
        ),
    )(h2d, w_lin_t, b_lin2)

    logits = logits2d.reshape(T, B, V)
    return logits, (hn.reshape(1, B, H), cn.reshape(1, B, H))


def _reference_forward(x_idx, hidden, params):
    """Pure-JAX reference matching PyTorch semantics (for correctness check)."""
    emb_tbl, w_ih, w_hh, b_ih, b_hh, w_lin, b_lin = params
    h0, c0 = hidden
    H = w_hh.shape[1]
    x_emb = jnp.take(emb_tbl, x_idx, axis=0)

    def step(carry, x_t):
        h, c = carry
        gates = x_t @ w_ih.T + h @ w_hh.T + b_ih + b_hh
        i = jax.nn.sigmoid(gates[:, 0:H])
        f = jax.nn.sigmoid(gates[:, H:2 * H])
        g = jnp.tanh(gates[:, 2 * H:3 * H])
        o = jax.nn.sigmoid(gates[:, 3 * H:4 * H])
        c_new = f * c + i * g
        h_new = o * jnp.tanh(c_new)
        return (h_new, c_new), h_new

    (hn, cn), hs = jax.lax.scan(step, (h0[0], c0[0]), x_emb)
    logits = hs @ w_lin.T + b_lin
    return logits, (hn[None], cn[None])


if __name__ == "__main__":
    # Small, vreg-aligned shapes consistent with the module
    # (embedding_dim=100, hidden_dim=128 from the spec; toy vocab).
    vocab_size = 256
    embedding_dim = 100
    hidden_dim = 128
    seq_len = 16
    batch = 8

    key = jax.random.PRNGKey(0)
    ks = jax.random.split(key, 10)
    scale = 1.0 / jnp.sqrt(hidden_dim)

    emb_tbl = jax.random.normal(ks[0], (vocab_size, embedding_dim), jnp.float32)
    w_ih = jax.random.uniform(ks[1], (4 * hidden_dim, embedding_dim),
                              jnp.float32, -scale, scale)
    w_hh = jax.random.uniform(ks[2], (4 * hidden_dim, hidden_dim),
                              jnp.float32, -scale, scale)
    b_ih = jax.random.uniform(ks[3], (4 * hidden_dim,), jnp.float32, -scale, scale)
    b_hh = jax.random.uniform(ks[4], (4 * hidden_dim,), jnp.float32, -scale, scale)
    w_lin = jax.random.uniform(ks[5], (vocab_size, hidden_dim),
                               jnp.float32, -scale, scale)
    b_lin = jax.random.uniform(ks[6], (vocab_size,), jnp.float32, -scale, scale)
    params = (emb_tbl, w_ih, w_hh, b_ih, b_hh, w_lin, b_lin)

    x_idx = jax.random.randint(ks[7], (seq_len, batch), 0, vocab_size, jnp.int32)
    h0 = jax.random.normal(ks[8], (1, batch, hidden_dim), jnp.float32)
    c0 = jax.random.normal(ks[9], (1, batch, hidden_dim), jnp.float32)

    # seq_chunk=8 -> 2 grid iterations; exercises the cross-chunk h/c carry.
    logits, (hn, cn) = language_model_forward(x_idx, (h0, c0), params, seq_chunk=8)
    jax.block_until_ready((logits, hn, cn))

    ref_logits, (ref_hn, ref_cn) = _reference_forward(x_idx, (h0, c0), params)
    assert logits.shape == (seq_len, batch, vocab_size)
    assert hn.shape == (1, batch, hidden_dim) and cn.shape == (1, batch, hidden_dim)
    assert jnp.allclose(logits, ref_logits, atol=1e-3, rtol=1e-3)
    assert jnp.allclose(hn, ref_hn, atol=1e-3, rtol=1e-3)
    assert jnp.allclose(cn, ref_cn, atol=1e-3, rtol=1e-3)

    print("KERNEL_OK")
</pallas_src>

<mosaic_0001>
module attributes {stable_mosaic.version = 11 : i64} {
  func.func @_lstm_recurrence_kernel(%arg0: i32, %arg1: memref<8x8x512xf32, #tpu.memory_space<vmem>>, %arg2: memref<8x128xf32, #tpu.memory_space<vmem>>, %arg3: memref<8x128xf32, #tpu.memory_space<vmem>>, %arg4: memref<128x512xf32, #tpu.memory_space<vmem>>, %arg5: memref<8x8x128xf32, #tpu.memory_space<vmem>>, %arg6: memref<8x128xf32, #tpu.memory_space<vmem>>, %arg7: memref<8x128xf32, #tpu.memory_space<vmem>>, %arg8: memref<8x128xf32, #tpu.memory_space<vmem>>, %arg9: memref<8x128xf32, #tpu.memory_space<vmem>>) attributes {dimension_semantics = [#tpu.dimension_semantics<arbitrary>], iteration_bounds = array<i64: 2>, scalar_prefetch = 0 : i64, scratch_operands = 2 : i64, tpu.core_type = #tpu.core_type<tc>, window_params = [{transform_indices = @transform_0, window_bounds = array<i64: 8, 8, 512>}, {pipeline_mode = #tpu.pipeline_mode<synchronous>, transform_indices = @transform_1, window_bounds = array<i64: 8, 128>}, {pipeline_mode = #tpu.pipeline_mode<synchronous>, transform_indices = @transform_2, window_bounds = array<i64: 8, 128>}, {pipeline_mode = #tpu.pipeline_mode<synchronous>, transform_indices = @transform_3, window_bounds = array<i64: 128, 512>}, {transform_indices = @transform_4, window_bounds = array<i64: 8, 8, 128>}, {pipeline_mode = #tpu.pipeline_mode<synchronous>, transform_indices = @transform_5, window_bounds = array<i64: 8, 128>}, {pipeline_mode = #tpu.pipeline_mode<synchronous>, transform_indices = @transform_6, window_bounds = array<i64: 8, 128>}]} {
    %c0_i32 = arith.constant 0 : i32
    %0 = arith.cmpi eq, %arg0, %c0_i32 : i32
    %1 = arith.extui %0 : i1 to i32
    %c0_i32_0 = arith.constant 0 : i32
    %2 = arith.cmpi ne, %1, %c0_i32_0 : i32
    scf.if %2 {
      %c0_76 = arith.constant 0 : index
      %c0_77 = arith.constant 0 : index
      %283 = vector.load %arg2[%c0_76, %c0_77] : memref<8x128xf32, #tpu.memory_space<vmem>>, vector<8x128xf32>
      %c0_78 = arith.constant 0 : index
      %c0_79 = arith.constant 0 : index
      %284 = vector.load %arg8[%c0_78, %c0_79] : memref<8x128xf32, #tpu.memory_space<vmem>>, vector<8x128xf32>
      tpu.vector_store %arg8[%c0_78, %c0_79], %283 {strides = array<i32>} : memref<8x128xf32, #tpu.memory_space<vmem>>, vector<8x128xf32>,
      %c0_80 = arith.constant 0 : index
      %c0_81 = arith.constant 0 : index
      %285 = vector.load %arg3[%c0_80, %c0_81] : memref<8x128xf32, #tpu.memory_space<vmem>>, vector<8x128xf32>
      %c0_82 = arith.constant 0 : index
      %c0_83 = arith.constant 0 : index
      %286 = vector.load %arg9[%c0_82, %c0_83] : memref<8x128xf32, #tpu.memory_space<vmem>>, vector<8x128xf32>
      tpu.vector_store %arg9[%c0_82, %c0_83], %285 {strides = array<i32>} : memref<8x128xf32, #tpu.memory_space<vmem>>, vector<8x128xf32>,
    } else {
    }
    %c0 = arith.constant 0 : index
    %c0_1 = arith.constant 0 : index
    %3 = vector.load %arg4[%c0, %c0_1] : memref<128x512xf32, #tpu.memory_space<vmem>>, vector<128x512xf32>
    %c0_2 = arith.constant 0 : index
    %c0_3 = arith.constant 0 : index
    %4 = vector.load %arg8[%c0_2, %c0_3] : memref<8x128xf32, #tpu.memory_space<vmem>>, vector<8x128xf32>
    %c0_4 = arith.constant 0 : index
    %c0_5 = arith.constant 0 : index
    %5 = vector.load %arg9[%c0_4, %c0_5] : memref<8x128xf32, #tpu.memory_space<vmem>>, vector<8x128xf32>
    %c0_i32_6 = arith.constant 0 : i32
    %6 = arith.index_cast %c0_i32_6 : i32 to index
    %c0_7 = arith.constant 0 : index
    %c0_8 = arith.constant 0 : index
    %7 = vector.load %arg1[%6, %c0_7, %c0_8] : memref<8x8x512xf32, #tpu.memory_space<vmem>>, vector<1x8x512xf32>
    %8 = vector.shape_cast %7 : vector<1x8x512xf32> to vector<8x512xf32>
    %cst = arith.constant dense<0.000000e+00> : vector<8x512xf32>
    %9 = tpu.matmul %4, %3, %cst {dimension_numbers = #tpu.dot_dimension_numbers<[1], [0], [0], [1], [0, 0, 1, 1], [], []>} : vector<8x128xf32>, vector<128x512xf32>, vector<8x512xf32> -> vector<8x512xf32>
    %10 = arith.addf %8, %9 : vector<8x512xf32>
    %11 = vector.extract_strided_slice %10 {offsets = [0, 0], sizes = [8, 128], strides = [1, 1]} : vector<8x512xf32> to vector<8x128xf32>
    %12 = arith.negf %11 : vector<8x128xf32>
    %13 = math.exp %12 : vector<8x128xf32>
    %cst_9 = arith.constant 1.000000e+00 : f32
    %14 = vector.broadcast %cst_9 : f32 to vector<8x128xf32>
    %15 = arith.addf %14, %13 : vector<8x128xf32>
    %16 = arith.divf %14, %15 : vector<8x128xf32>
    %17 = vector.extract_strided_slice %10 {offsets = [0, 128], sizes = [8, 128], strides = [1, 1]} : vector<8x512xf32> to vector<8x128xf32>
    %18 = arith.negf %17 : vector<8x128xf32>
    %19 = math.exp %18 : vector<8x128xf32>
    %cst_10 = arith.constant 1.000000e+00 : f32
    %20 = vector.broadcast %cst_10 : f32 to vector<8x128xf32>
    %21 = arith.addf %20, %19 : vector<8x128xf32>
    %22 = arith.divf %20, %21 : vector<8x128xf32>
    %23 = vector.extract_strided_slice %10 {offsets = [0, 256], sizes = [8, 128], strides = [1, 1]} : vector<8x512xf32> to vector<8x128xf32>
    %24 = math.tanh %23 : vector<8x128xf32>
    %25 = vector.extract_strided_slice %10 {offsets = [0, 384], sizes = [8, 128], strides = [1, 1]} : vector<8x512xf32> to vector<8x128xf32>
    %26 = arith.negf %25 : vector<8x128xf32>
    %27 = math.exp %26 : vector<8x128xf32>
    %cst_11 = arith.constant 1.000000e+00 : f32
    %28 = vector.broadcast %cst_11 : f32 to vector<8x128xf32>
    %29 = arith.addf %28, %27 : vector<8x128xf32>
    %30 = arith.divf %28, %29 : vector<8x128xf32>
    %31 = arith.mulf %22, %5 : vector<8x128xf32>
    %32 = arith.mulf %16, %24 : vector<8x128xf32>
    %33 = arith.addf %31, %32 : vector<8x128xf32>
    %34 = math.tanh %33 : vector<8x128xf32>
    %35 = arith.mulf %30, %34 : vector<8x128xf32>
    %36 = arith.index_cast %c0_i32_6 : i32 to index
    %c0_12 = arith.constant 0 : index
    %c0_13 = arith.constant 0 : index
    %37 = vector.load %arg5[%36, %c0_12, %c0_13] : memref<8x8x128xf32, #tpu.memory_space<vmem>>, vector<1x8x128xf32>
    %38 = vector.shape_cast %37 : vector<1x8x128xf32> to vector<8x128xf32>
    %39 = vector.shape_cast %35 : vector<8x128xf32> to vector<1x8x128xf32>
    tpu.vector_store %arg5[%36, %c0_12, %c0_13], %39 {strides = array<i32>} : memref<8x8x128xf32, #tpu.memory_space<vmem>>, vector<1x8x128xf32>,
    %c1_i32 = arith.constant 1 : i32
    %40 = arith.index_cast %c1_i32 : i32 to index
    %c0_14 = arith.constant 0 : index
    %c0_15 = arith.constant 0 : index
    %41 = vector.load %arg1[%40, %c0_14, %c0_15] : memref<8x8x512xf32, #tpu.memory_space<vmem>>, vector<1x8x512xf32>
    %42 = vector.shape_cast %41 : vector<1x8x512xf32> to vector<8x512xf32>
    %cst_16 = arith.constant dense<0.000000e+00> : vector<8x512xf32>
    %43 = tpu.matmul %35, %3, %cst_16 {dimension_numbers = #tpu.dot_dimension_numbers<[1], [0], [0], [1], [0, 0, 1, 1], [], []>} : vector<8x128xf32>, vector<128x512xf32>, vector<8x512xf32> -> vector<8x512xf32>
    %44 = arith.addf %42, %43 : vector<8x512xf32>
    %45 = vector.extract_strided_slice %44 {offsets = [0, 0], sizes = [8, 128], strides = [1, 1]} : vector<8x512xf32> to vector<8x128xf32>
    %46 = arith.negf %45 : vector<8x128xf32>
    %47 = math.exp %46 : vector<8x128xf32>
    %cst_17 = arith.constant 1.000000e+00 : f32
    %48 = vector.broadcast %cst_17 : f32 to vector<8x128xf32>
    %49 = arith.addf %48, %47 : vector<8x128xf32>
    %50 = arith.divf %48, %49 : vector<8x128xf32>
    %51 = vector.extract_strided_slice %44 {offsets = [0, 128], sizes = [8, 128], strides = [1, 1]} : vector<8x512xf32> to vector<8x128xf32>
    %52 = arith.negf %51 : vector<8x128xf32>
    %53 = math.exp %52 : vector<8x128xf32>
    %cst_18 = arith.constant 1.000000e+00 : f32
    %54 = vector.broadcast %cst_18 : f32 to vector<8x128xf32>
    %55 = arith.addf %54, %53 : vector<8x128xf32>
    %56 = arith.divf %54, %55 : vector<8x128xf32>
    %57 = vector.extract_strided_slice %44 {offsets = [0, 256], sizes = [8, 128], strides = [1, 1]} : vector<8x512xf32> to vector<8x128xf32>
    %58 = math.tanh %57 : vector<8x128xf32>
    %59 = vector.extract_strided_slice %44 {offsets = [0, 384], sizes = [8, 128], strides = [1, 1]} : vector<8x512xf32> to vector<8x128xf32>
    %60 = arith.negf %59 : vector<8x128xf32>
    %61 = math.exp %60 : vector<8x128xf32>
    %cst_19 = arith.constant 1.000000e+00 : f32
    %62 = vector.broadcast %cst_19 : f32 to vector<8x128xf32>
    %63 = arith.addf %62, %61 : vector<8x128xf32>
    %64 = arith.divf %62, %63 : vector<8x128xf32>
    %65 = arith.mulf %56, %33 : vector<8x128xf32>
    %66 = arith.mulf %50, %58 : vector<8x128xf32>
    %67 = arith.addf %65, %66 : vector<8x128xf32>
    %68 = math.tanh %67 : vector<8x128xf32>
    %69 = arith.mulf %64, %68 : vector<8x128xf32>
    %70 = arith.index_cast %c1_i32 : i32 to index
    %c0_20 = arith.constant 0 : index
    %c0_21 = arith.constant 0 : index
    %71 = vector.load %arg5[%70, %c0_20, %c0_21] : memref<8x8x128xf32, #tpu.memory_space<vmem>>, vector<1x8x128xf32>
    %72 = vector.shape_cast %71 : vector<1x8x128xf32> to vector<8x128xf32>
    %73 = vector.shape_cast %69 : vector<8x128xf32> to vector<1x8x128xf32>
    tpu.vector_store %arg5[%70, %c0_20, %c0_21], %73 {strides = array<i32>} : memref<8x8x128xf32, #tpu.memory_space<vmem>>, vector<1x8x128xf32>,
    %c2_i32 = arith.constant 2 : i32
    %74 = arith.index_cast %c2_i32 : i32 to index
    %c0_22 = arith.constant 0 : index
    %c0_23 = arith.constant 0 : index
    %75 = vector.load %arg1[%74, %c0_22, %c0_23] : memref<8x8x512xf32, #tpu.memory_space<vmem>>, vector<1x8x512xf32>
    %76 = vector.shape_cast %75 : vector<1x8x512xf32> to vector<8x512xf32>
    %cst_24 = arith.constant dense<0.000000e+00> : vector<8x512xf32>
    %77 = tpu.matmul %69, %3, %cst_24 {dimension_numbers = #tpu.dot_dimension_numbers<[1], [0], [0], [1], [0, 0, 1, 1], [], []>} : vector<8x128xf32>, vector<128x512xf32>, vector<8x512xf32> -> vector<8x512xf32>
    %78 = arith.addf %76, %77 : vector<8x512xf32>
    %79 = vector.extract_strided_slice %78 {offsets = [0, 0], sizes = [8, 128], strides = [1, 1]} : vector<8x512xf32> to vector<8x128xf32>
    %80 = arith.negf %79 : vector<8x128xf32>
    %81 = math.exp %80 : vector<8x128xf32>
    %cst_25 = arith.constant 1.000000e+00 : f32
    %82 = vector.broadcast %cst_25 : f32 to vector<8x128xf32>
    %83 = arith.addf %82, %81 : vector<8x128xf32>
    %84 = arith.divf %82, %83 : vector<8x128xf32>
    %85 = vector.extract_strided_slice %78 {offsets = [0, 128], sizes = [8, 128], strides = [1, 1]} : vector<8x512xf32> to vector<8x128xf32>
    %86 = arith.negf %85 : vector<8x128xf32>
    %87 = math.exp %86 : vector<8x128xf32>
    %cst_26 = arith.constant 1.000000e+00 : f32
    %88 = vector.broadcast %cst_26 : f32 to vector<8x128xf32>
    %89 = arith.addf %88, %87 : vector<8x128xf32>
    %90 = arith.divf %88, %89 : vector<8x128xf32>
    %91 = vector.extract_strided_slice %78 {offsets = [0, 256], sizes = [8, 128], strides = [1, 1]} : vector<8x512xf32> to vector<8x128xf32>
    %92 = math.tanh %91 : vector<8x128xf32>
    %93 = vector.extract_strided_slice %78 {offsets = [0, 384], sizes = [8, 128], strides = [1, 1]} : vector<8x512xf32> to vector<8x128xf32>
    %94 = arith.negf %93 : vector<8x128xf32>
    %95 = math.exp %94 : vector<8x128xf32>
    %cst_27 = arith.constant 1.000000e+00 : f32
    %96 = vector.broadcast %cst_27 : f32 to vector<8x128xf32>
    %97 = arith.addf %96, %95 : vector<8x128xf32>
    %98 = arith.divf %96, %97 : vector<8x128xf32>
    %99 = arith.mulf %90, %67 : vector<8x128xf32>
    %100 = arith.mulf %84, %92 : vector<8x128xf32>
    %101 = arith.addf %99, %100 : vector<8x128xf32>
    %102 = math.tanh %101 : vector<8x128xf32>
    %103 = arith.mulf %98, %102 : vector<8x128xf32>
    %104 = arith.index_cast %c2_i32 : i32 to index
    %c0_28 = arith.constant 0 : index
    %c0_29 = arith.constant 0 : index
    %105 = vector.load %arg5[%104, %c0_28, %c0_29] : memref<8x8x128xf32, #tpu.memory_space<vmem>>, vector<1x8x128xf32>
    %106 = vector.shape_cast %105 : vector<1x8x128xf32> to vector<8x128xf32>
    %107 = vector.shape_cast %103 : vector<8x128xf32> to vector<1x8x128xf32>
    tpu.vector_store %arg5[%104, %c0_28, %c0_29], %107 {strides = array<i32>} : memref<8x8x128xf32, #tpu.memory_space<vmem>>, vector<1x8x128xf32>,
    %c3_i32 = arith.constant 3 : i32
    %108 = arith.index_cast %c3_i32 : i32 to index
    %c0_30 = arith.constant 0 : index
    %c0_31 = arith.constant 0 : index
    %109 = vector.load %arg1[%108, %c0_30, %c0_31] : memref<8x8x512xf32, #tpu.memory_space<vmem>>, vector<1x8x512xf32>
    %110 = vector.shape_cast %109 : vector<1x8x512xf32> to vector<8x512xf32>
    %cst_32 = arith.constant dense<0.000000e+00> : vector<8x512xf32>
    %111 = tpu.matmul %103, %3, %cst_32 {dimension_numbers = #tpu.dot_dimension_numbers<[1], [0], [0], [1], [0, 0, 1, 1], [], []>} : vector<8x128xf32>, vector<128x512xf32>, vector<8x512xf32> -> vector<8x512xf32>
    %112 = arith.addf %110, %111 : vector<8x512xf32>
    %113 = vector.extract_strided_slice %112 {offsets = [0, 0], sizes = [8, 128], strides = [1, 1]} : vector<8x512xf32> to vector<8x128xf32>
    %114 = arith.negf %113 : vector<8x128xf32>
    %115 = math.exp %114 : vector<8x128xf32>
    %cst_33 = arith.constant 1.000000e+00 : f32
    %116 = vector.broadcast %cst_33 : f32 to vector<8x128xf32>
    %117 = arith.addf %116, %115 : vector<8x128xf32>
    %118 = arith.divf %116, %117 : vector<8x128xf32>
    %119 = vector.extract_strided_slice %112 {offsets = [0, 128], sizes = [8, 128], strides = [1, 1]} : vector<8x512xf32> to vector<8x128xf32>
    %120 = arith.negf %119 : vector<8x128xf32>
    %121 = math.exp %120 : vector<8x128xf32>
    %cst_34 = arith.constant 1.000000e+00 : f32
    %122 = vector.broadcast %cst_34 : f32 to vector<8x128xf32>
    %123 = arith.addf %122, %121 : vector<8x128xf32>
    %124 = arith.divf %122, %123 : vector<8x128xf32>
    %125 = vector.extract_strided_slice %112 {offsets = [0, 256], sizes = [8, 128], strides = [1, 1]} : vector<8x512xf32> to vector<8x128xf32>
    %126 = math.tanh %125 : vector<8x128xf32>
    %127 = vector.extract_strided_slice %112 {offsets = [0, 384], sizes = [8, 128], strides = [1, 1]} : vector<8x512xf32> to vector<8x128xf32>
    %128 = arith.negf %127 : vector<8x128xf32>
    %129 = math.exp %128 : vector<8x128xf32>
    %cst_35 = arith.constant 1.000000e+00 : f32
    %130 = vector.broadcast %cst_35 : f32 to vector<8x128xf32>
    %131 = arith.addf %130, %129 : vector<8x128xf32>
    %132 = arith.divf %130, %131 : vector<8x128xf32>
    %133 = arith.mulf %124, %101 : vector<8x128xf32>
    %134 = arith.mulf %118, %126 : vector<8x128xf32>
    %135 = arith.addf %133, %134 : vector<8x128xf32>
    %136 = math.tanh %135 : vector<8x128xf32>
    %137 = arith.mulf %132, %136 : vector<8x128xf32>
    %138 = arith.index_cast %c3_i32 : i32 to index
    %c0_36 = arith.constant 0 : index
    %c0_37 = arith.constant 0 : index
    %139 = vector.load %arg5[%138, %c0_36, %c0_37] : memref<8x8x128xf32, #tpu.memory_space<vmem>>, vector<1x8x128xf32>
    %140 = vector.shape_cast %139 : vector<1x8x128xf32> to vector<8x128xf32>
    %141 = vector.shape_cast %137 : vector<8x128xf32> to vector<1x8x128xf32>
    tpu.vector_store %arg5[%138, %c0_36, %c0_37], %141 {strides = array<i32>} : memref<8x8x128xf32, #tpu.memory_space<vmem>>, vector<1x8x128xf32>,
    %c4_i32 = arith.constant 4 : i32
    %142 = arith.index_cast %c4_i32 : i32 to index
    %c0_38 = arith.constant 0 : index
    %c0_39 = arith.constant 0 : index
    %143 = vector.load %arg1[%142, %c0_38, %c0_39] : memref<8x8x512xf32, #tpu.memory_space<vmem>>, vector<1x8x512xf32>
    %144 = vector.shape_cast %143 : vector<1x8x512xf32> to vector<8x512xf32>
    %cst_40 = arith.constant dense<0.000000e+00> : vector<8x512xf32>
    %145 = tpu.matmul %137, %3, %cst_40 {dimension_numbers = #tpu.dot_dimension_numbers<[1], [0], [0], [1], [0, 0, 1, 1], [], []>} : vector<8x128xf32>, vector<128x512xf32>, vector<8x512xf32> -> vector<8x512xf32>
    %146 = arith.addf %144, %145 : vector<8x512xf32>
    %147 = vector.extract_strided_slice %146 {offsets = [0, 0], sizes = [8, 128], strides = [1, 1]} : vector<8x512xf32> to vector<8x128xf32>
    %148 = arith.negf %147 : vector<8x128xf32>
    %149 = math.exp %148 : vector<8x128xf32>
    %cst_41 = arith.constant 1.000000e+00 : f32
    %150 = vector.broadcast %cst_41 : f32 to vector<8x128xf32>
    %151 = arith.addf %150, %149 : vector<8x128xf32>
    %152 = arith.divf %150, %151 : vector<8x128xf32>
    %153 = vector.extract_strided_slice %146 {offsets = [0, 128], sizes = [8, 128], strides = [1, 1]} : vector<8x512xf32> to vector<8x128xf32>
    %154 = arith.negf %153 : vector<8x128xf32>
    %155 = math.exp %154 : vector<8x128xf32>
    %cst_42 = arith.constant 1.000000e+00 : f32
    %156 = vector.broadcast %cst_42 : f32 to vector<8x128xf32>
    %157 = arith.addf %156, %155 : vector<8x128xf32>
    %158 = arith.divf %156, %157 : vector<8x128xf32>
    %159 = vector.extract_strided_slice %146 {offsets = [0, 256], sizes = [8, 128], strides = [1, 1]} : vector<8x512xf32> to vector<8x128xf32>
    %160 = math.tanh %159 : vector<8x128xf32>
    %161 = vector.extract_strided_slice %146 {offsets = [0, 384], sizes = [8, 128], strides = [1, 1]} : vector<8x512xf32> to vector<8x128xf32>
    %162 = arith.negf %161 : vector<8x128xf32>
    %163 = math.exp %162 : vector<8x128xf32>
    %cst_43 = arith.constant 1.000000e+00 : f32
    %164 = vector.broadcast %cst_43 : f32 to vector<8x128xf32>
    %165 = arith.addf %164, %163 : vector<8x128xf32>
    %166 = arith.divf %164, %165 : vector<8x128xf32>
    %167 = arith.mulf %158, %135 : vector<8x128xf32>
    %168 = arith.mulf %152, %160 : vector<8x128xf32>
    %169 = arith.addf %167, %168 : vector<8x128xf32>
    %170 = math.tanh %169 : vector<8x128xf32>
    %171 = arith.mulf %166, %170 : vector<8x128xf32>
    %172 = arith.index_cast %c4_i32 : i32 to index
    %c0_44 = arith.constant 0 : index
    %c0_45 = arith.constant 0 : index
    %173 = vector.load %arg5[%172, %c0_44, %c0_45] : memref<8x8x128xf32, #tpu.memory_space<vmem>>, vector<1x8x128xf32>
    %174 = vector.shape_cast %173 : vector<1x8x128xf32> to vector<8x128xf32>
    %175 = vector.shape_cast %171 : vector<8x128xf32> to vector<1x8x128xf32>
    tpu.vector_store %arg5[%172, %c0_44, %c0_45], %175 {strides = array<i32>} : memref<8x8x128xf32, #tpu.memory_space<vmem>>, vector<1x8x128xf32>,
    %c5_i32 = arith.constant 5 : i32
    %176 = arith.index_cast %c5_i32 : i32 to index
    %c0_46 = arith.constant 0 : index
    %c0_47 = arith.constant 0 : index
    %177 = vector.load %arg1[%176, %c0_46, %c0_47] : memref<8x8x512xf32, #tpu.memory_space<vmem>>, vector<1x8x512xf32>
    %178 = vector.shape_cast %177 : vector<1x8x512xf32> to vector<8x512xf32>
    %cst_48 = arith.constant dense<0.000000e+00> : vector<8x512xf32>
    %179 = tpu.matmul %171, %3, %cst_48 {dimension_numbers = #tpu.dot_dimension_numbers<[1], [0], [0], [1], [0, 0, 1, 1], [], []>} : vector<8x128xf32>, vector<128x512xf32>, vector<8x512xf32> -> vector<8x512xf32>
    %180 = arith.addf %178, %179 : vector<8x512xf32>
    %181 = vector.extract_strided_slice %180 {offsets = [0, 0], sizes = [8, 128], strides = [1, 1]} : vector<8x512xf32> to vector<8x128xf32>
    %182 = arith.negf %181 : vector<8x128xf32>
    %183 = math.exp %182 : vector<8x128xf32>
    %cst_49 = arith.constant 1.000000e+00 : f32
    %184 = vector.broadcast %cst_49 : f32 to vector<8x128xf32>
    %185 = arith.addf %184, %183 : vector<8x128xf32>
    %186 = arith.divf %184, %185 : vector<8x128xf32>
    %187 = vector.extract_strided_slice %180 {offsets = [0, 128], sizes = [8, 128], strides = [1, 1]} : vector<8x512xf32> to vector<8x128xf32>
    %188 = arith.negf %187 : vector<8x128xf32>
    %189 = math.exp %188 : vector<8x128xf32>
    %cst_50 = arith.constant 1.000000e+00 : f32
    %190 = vector.broadcast %cst_50 : f32 to vector<8x128xf32>
    %191 = arith.addf %190, %189 : vector<8x128xf32>
    %192 = arith.divf %190, %191 : vector<8x128xf32>
    %193 = vector.extract_strided_slice %180 {offsets = [0, 256], sizes = [8, 128], strides = [1, 1]} : vector<8x512xf32> to vector<8x128xf32>
    %194 = math.tanh %193 : vector<8x128xf32>
    %195 = vector.extract_strided_slice %180 {offsets = [0, 384], sizes = [8, 128], strides = [1, 1]} : vector<8x512xf32> to vector<8x128xf32>
    %196 = arith.negf %195 : vector<8x128xf32>
    %197 = math.exp %196 : vector<8x128xf32>
    %cst_51 = arith.constant 1.000000e+00 : f32
    %198 = vector.broadcast %cst_51 : f32 to vector<8x128xf32>
    %199 = arith.addf %198, %197 : vector<8x128xf32>
    %200 = arith.divf %198, %199 : vector<8x128xf32>
    %201 = arith.mulf %192, %169 : vector<8x128xf32>
    %202 = arith.mulf %186, %194 : vector<8x128xf32>
    %203 = arith.addf %201, %202 : vector<8x128xf32>
    %204 = math.tanh %203 : vector<8x128xf32>
    %205 = arith.mulf %200, %204 : vector<8x128xf32>
    %206 = arith.index_cast %c5_i32 : i32 to index
    %c0_52 = arith.constant 0 : index
    %c0_53 = arith.constant 0 : index
    %207 = vector.load %arg5[%206, %c0_52, %c0_53] : memref<8x8x128xf32, #tpu.memory_space<vmem>>, vector<1x8x128xf32>
    %208 = vector.shape_cast %207 : vector<1x8x128xf32> to vector<8x128xf32>
    %209 = vector.shape_cast %205 : vector<8x128xf32> to vector<1x8x128xf32>
    tpu.vector_store %arg5[%206, %c0_52, %c0_53], %209 {strides = array<i32>} : memref<8x8x128xf32, #tpu.memory_space<vmem>>, vector<1x8x128xf32>,
    %c6_i32 = arith.constant 6 : i32
    %210 = arith.index_cast %c6_i32 : i32 to index
    %c0_54 = arith.constant 0 : index
    %c0_55 = arith.constant 0 : index
    %211 = vector.load %arg1[%210, %c0_54, %c0_55] : memref<8x8x512xf32, #tpu.memory_space<vmem>>, vector<1x8x512xf32>
    %212 = vector.shape_cast %211 : vector<1x8x512xf32> to vector<8x512xf32>
    %cst_56 = arith.constant dense<0.000000e+00> : vector<8x512xf32>
    %213 = tpu.matmul %205, %3, %cst_56 {dimension_numbers = #tpu.dot_dimension_numbers<[1], [0], [0], [1], [0, 0, 1, 1], [], []>} : vector<8x128xf32>, vector<128x512xf32>, vector<8x512xf32> -> vector<8x512xf32>
    %214 = arith.addf %212, %213 : vector<8x512xf32>
    %215 = vector.extract_strided_slice %214 {offsets = [0, 0], sizes = [8, 128], strides = [1, 1]} : vector<8x512xf32> to vector<8x128xf32>
    %216 = arith.negf %215 : vector<8x128xf32>
    %217 = math.exp %216 : vector<8x128xf32>
    %cst_57 = arith.constant 1.000000e+00 : f32
    %218 = vector.broadcast %cst_57 : f32 to vector<8x128xf32>
    %219 = arith.addf %218, %217 : vector<8x128xf32>
    %220 = arith.divf %218, %219 : vector<8x128xf32>
    %221 = vector.extract_strided_slice %214 {offsets = [0, 128], sizes = [8, 128], strides = [1, 1]} : vector<8x512xf32> to vector<8x128xf32>
    %222 = arith.negf %221 : vector<8x128xf32>
    %223 = math.exp %222 : vector<8x128xf32>
    %cst_58 = arith.constant 1.000000e+00 : f32
    %224 = vector.broadcast %cst_58 : f32 to vector<8x128xf32>
    %225 = arith.addf %224, %223 : vector<8x128xf32>
    %226 = arith.divf %224, %225 : vector<8x128xf32>
    %227 = vector.extract_strided_slice %214 {offsets = [0, 256], sizes = [8, 128], strides = [1, 1]} : vector<8x512xf32> to vector<8x128xf32>
    %228 = math.tanh %227 : vector<8x128xf32>
    %229 = vector.extract_strided_slice %214 {offsets = [0, 384], sizes = [8, 128], strides = [1, 1]} : vector<8x512xf32> to vector<8x128xf32>
    %230 = arith.negf %229 : vector<8x128xf32>
    %231 = math.exp %230 : vector<8x128xf32>
    %cst_59 = arith.constant 1.000000e+00 : f32
    %232 = vector.broadcast %cst_59 : f32 to vector<8x128xf32>
    %233 = arith.addf %232, %231 : vector<8x128xf32>
    %234 = arith.divf %232, %233 : vector<8x128xf32>
    %235 = arith.mulf %226, %203 : vector<8x128xf32>
    %236 = arith.mulf %220, %228 : vector<8x128xf32>
    %237 = arith.addf %235, %236 : vector<8x128xf32>
    %238 = math.tanh %237 : vector<8x128xf32>
    %239 = arith.mulf %234, %238 : vector<8x128xf32>
    %240 = arith.index_cast %c6_i32 : i32 to index
    %c0_60 = arith.constant 0 : index
    %c0_61 = arith.constant 0 : index
    %241 = vector.load %arg5[%240, %c0_60, %c0_61] : memref<8x8x128xf32, #tpu.memory_space<vmem>>, vector<1x8x128xf32>
    %242 = vector.shape_cast %241 : vector<1x8x128xf32> to vector<8x128xf32>
    %243 = vector.shape_cast %239 : vector<8x128xf32> to vector<1x8x128xf32>
    tpu.vector_store %arg5[%240, %c0_60, %c0_61], %243 {strides = array<i32>} : memref<8x8x128xf32, #tpu.memory_space<vmem>>, vector<1x8x128xf32>,
    %c7_i32 = arith.constant 7 : i32
    %244 = arith.index_cast %c7_i32 : i32 to index
    %c0_62 = arith.constant 0 : index
    %c0_63 = arith.constant 0 : index
    %245 = vector.load %arg1[%244, %c0_62, %c0_63] : memref<8x8x512xf32, #tpu.memory_space<vmem>>, vector<1x8x512xf32>
    %246 = vector.shape_cast %245 : vector<1x8x512xf32> to vector<8x512xf32>
    %cst_64 = arith.constant dense<0.000000e+00> : vector<8x512xf32>
    %247 = tpu.matmul %239, %3, %cst_64 {dimension_numbers = #tpu.dot_dimension_numbers<[1], [0], [0], [1], [0, 0, 1, 1], [], []>} : vector<8x128xf32>, vector<128x512xf32>, vector<8x512xf32> -> vector<8x512xf32>
    %248 = arith.addf %246, %247 : vector<8x512xf32>
    %249 = vector.extract_strided_slice %248 {offsets = [0, 0], sizes = [8, 128], strides = [1, 1]} : vector<8x512xf32> to vector<8x128xf32>
    %250 = arith.negf %249 : vector<8x128xf32>
    %251 = math.exp %250 : vector<8x128xf32>
    %cst_65 = arith.constant 1.000000e+00 : f32
    %252 = vector.broadcast %cst_65 : f32 to vector<8x128xf32>
    %253 = arith.addf %252, %251 : vector<8x128xf32>
    %254 = arith.divf %252, %253 : vector<8x128xf32>
    %255 = vector.extract_strided_slice %248 {offsets = [0, 128], sizes = [8, 128], strides = [1, 1]} : vector<8x512xf32> to vector<8x128xf32>
    %256 = arith.negf %255 : vector<8x128xf32>
    %257 = math.exp %256 : vector<8x128xf32>
    %cst_66 = arith.constant 1.000000e+00 : f32
    %258 = vector.broadcast %cst_66 : f32 to vector<8x128xf32>
    %259 = arith.addf %258, %257 : vector<8x128xf32>
    %260 = arith.divf %258, %259 : vector<8x128xf32>
    %261 = vector.extract_strided_slice %248 {offsets = [0, 256], sizes = [8, 128], strides = [1, 1]} : vector<8x512xf32> to vector<8x128xf32>
    %262 = math.tanh %261 : vector<8x128xf32>
    %263 = vector.extract_strided_slice %248 {offsets = [0, 384], sizes = [8, 128], strides = [1, 1]} : vector<8x512xf32> to vector<8x128xf32>
    %264 = arith.negf %263 : vector<8x128xf32>
    %265 = math.exp %264 : vector<8x128xf32>
    %cst_67 = arith.constant 1.000000e+00 : f32
    %266 = vector.broadcast %cst_67 : f32 to vector<8x128xf32>
    %267 = arith.addf %266, %265 : vector<8x128xf32>
    %268 = arith.divf %266, %267 : vector<8x128xf32>
    %269 = arith.mulf %260, %237 : vector<8x128xf32>
    %270 = arith.mulf %254, %262 : vector<8x128xf32>
    %271 = arith.addf %269, %270 : vector<8x128xf32>
    %272 = math.tanh %271 : vector<8x128xf32>
    %273 = arith.mulf %268, %272 : vector<8x128xf32>
    %274 = arith.index_cast %c7_i32 : i32 to index
    %c0_68 = arith.constant 0 : index
    %c0_69 = arith.constant 0 : index
    %275 = vector.load %arg5[%274, %c0_68, %c0_69] : memref<8x8x128xf32, #tpu.memory_space<vmem>>, vector<1x8x128xf32>
    %276 = vector.shape_cast %275 : vector<1x8x128xf32> to vector<8x128xf32>
    %277 = vector.shape_cast %273 : vector<8x128xf32> to vector<1x8x128xf32>
    tpu.vector_store %arg5[%274, %c0_68, %c0_69], %277 {strides = array<i32>} : memref<8x8x128xf32, #tpu.memory_space<vmem>>, vector<1x8x128xf32>,
    %c8_i32 = arith.constant 8 : i32
    %c0_70 = arith.constant 0 : index
    %c0_71 = arith.constant 0 : index
    %278 = vector.load %arg8[%c0_70, %c0_71] : memref<8x128xf32, #tpu.memory_space<vmem>>, vector<8x128xf32>
    tpu.vector_store %arg8[%c0_70, %c0_71], %273 {strides = array<i32>} : memref<8x128xf32, #tpu.memory_space<vmem>>, vector<8x128xf32>,
    %c0_72 = arith.constant 0 : index
    %c0_73 = arith.constant 0 : index
    %279 = vector.load %arg9[%c0_72, %c0_73] : memref<8x128xf32, #tpu.memory_space<vmem>>, vector<8x128xf32>
    tpu.vector_store %arg9[%c0_72, %c0_73], %271 {strides = array<i32>} : memref<8x128xf32, #tpu.memory_space<vmem>>, vector<8x128xf32>,
    %c1_i32_74 = arith.constant 1 : i32
    %280 = arith.cmpi eq, %arg0, %c1_i32_74 : i32
    %281 = arith.extui %280 : i1 to i32
    %c0_i32_75 = arith.constant 0 : i32
    %282 = arith.cmpi ne, %281, %c0_i32_75 : i32
    scf.if %282 {
      %c0_76 = arith.constant 0 : index
      %c0_77 = arith.constant 0 : index
      %283 = vector.load %arg6[%c0_76, %c0_77] : memref<8x128xf32, #tpu.memory_space<vmem>>, vector<8x128xf32>
      tpu.vector_store %arg6[%c0_76, %c0_77], %273 {strides = array<i32>} : memref<8x128xf32, #tpu.memory_space<vmem>>, vector<8x128xf32>,
      %c0_78 = arith.constant 0 : index
      %c0_79 = arith.constant 0 : index
      %284 = vector.load %arg7[%c0_78, %c0_79] : memref<8x128xf32, #tpu.memory_space<vmem>>, vector<8x128xf32>
      tpu.vector_store %arg7[%c0_78, %c0_79], %271 {strides = array<i32>} : memref<8x128xf32, #tpu.memory_space<vmem>>, vector<8x128xf32>,
    } else {
    }
    return
  }
  func.func @transform_0(%arg0: i32) -> (i32, i32, i32) {
    %c0_i32 = arith.constant 0 : i32
    %c0_i32_0 = arith.constant 0 : i32
    %c0_i32_1 = arith.constant 0 : i32
    return %arg0, %c0_i32, %c0_i32_0 : i32, i32, i32
  }
  func.func @transform_1(%arg0: i32) -> (i32, i32) {
    %c0_i32 = arith.constant 0 : i32
    %c0_i32_0 = arith.constant 0 : i32
    %c0_i32_1 = arith.constant 0 : i32
    return %c0_i32, %c0_i32_0 : i32, i32
  }
  func.func @transform_2(%arg0: i32) -> (i32, i32) {
    %c0_i32 = arith.constant 0 : i32
    %c0_i32_0 = arith.constant 0 : i32
    %c0_i32_1 = arith.constant 0 : i32
    return %c0_i32, %c0_i32_0 : i32, i32
  }
  func.func @transform_3(%arg0: i32) -> (i32, i32) {
    %c0_i32 = arith.constant 0 : i32
    %c0_i32_0 = arith.constant 0 : i32
    %c0_i32_1 = arith.constant 0 : i32
    return %c0_i32, %c0_i32_0 : i32, i32
  }
  func.func @transform_4(%arg0: i32) -> (i32, i32, i32) {
    %c0_i32 = arith.constant 0 : i32
    %c0_i32_0 = arith.constant 0 : i32
    %c0_i32_1 = arith.constant 0 : i32
    return %arg0, %c0_i32, %c0_i32_0 : i32, i32, i32
  }
  func.func @transform_5(%arg0: i32) -> (i32, i32) {
    %c0_i32 = arith.constant 0 : i32
    %c0_i32_0 = arith.constant 0 : i32
    %c0_i32_1 = arith.constant 0 : i32
    return %c0_i32, %c0_i32_0 : i32, i32
  }
  func.func @transform_6(%arg0: i32) -> (i32, i32) {
    %c0_i32 = arith.constant 0 : i32
    %c0_i32_0 = arith.constant 0 : i32
    %c0_i32_1 = arith.constant 0 : i32
    return %c0_i32, %c0_i32_0 : i32, i32
  }
}

</mosaic_0001>

<llo_original>
// kernel: tpu_custom_call.1
$region0: #{tpu_custom_call.1}
  #allocation0 [shape = 'u32[]', space=smem, size = 0x4, offset = 0x4, fixed_abs, tag = 'smem constant byte address 0x4 - core index']
  #allocation1 [shape = 'u32[144,128]{1,0:T(1,128)}', space=vmem, size = 0x12000, scoped, tag = 'internal scratch']
  #allocation2 [shape = 'f32[8,128]{1,0:T(8,128)}', space=vmem, size = 0x1000, scoped, tag = 'scratch operand']
  #allocation3 [shape = 'f32[8,128]{1,0:T(8,128)}', space=vmem, size = 0x1000, scoped, tag = 'scratch operand']
  %s0 = inlined_call_operand.hbm [shape: f32[16,8,512], index: 0, kind: input, shape index: {}]
  %s1 = inlined_call_operand.hbm [shape: f32[8,128], index: 1, kind: input, shape index: {}]
  %s2 = inlined_call_operand.hbm [shape: f32[8,128], index: 2, kind: input, shape index: {}]
  %s3 = inlined_call_operand.hbm [shape: f32[128,512], index: 3, kind: input, shape index: {}]
  %s4 = inlined_call_operand.hbm [shape: f32[16,8,128], index: 4, kind: output, shape index: {0}]
  %s5 = inlined_call_operand.hbm [shape: f32[8,128], index: 5, kind: output, shape index: {1}]
  %s6 = inlined_call_operand.hbm [shape: f32[8,128], index: 6, kind: output, shape index: {2}]
  %7 = xla_tuple %s4, %s5, %s6
  %s8 = sld [smem:[#allocation0]]
  $region89: #{tpu_custom_call.1} parent=0
    _
  %s10 = ssub.s32 1, %s8
  %s11 = scalar_select 0, %s10, %s8
  $region1: #{tpu_custom_call.1} parent=0
    #allocation4 [shape = 'u8[262144]{0}', space=vmem, size = 0x40000, scoped, tag = 'input window, operand 0']
    #allocation5 [shape = 's32[2]{0}', space=sflag, size = 0x8, scoped, tag = 'scoped memory for tpu_custom_call.1']
    #allocation6 [shape = 's32[2]{0}', space=sflag, size = 0x8, scoped, tag = 'scoped memory for tpu_custom_call.1']
    #allocation7 [shape = 'u8[4096]{0}', space=vmem, size = 0x1000, scoped, tag = 'input window, operand 1, single buffered']
    #allocation8 [shape = 's32[1]{0}', space=sflag, size = 0x4, scoped, tag = 'scoped memory for tpu_custom_call.1']
    #allocation9 [shape = 'u8[4096]{0}', space=vmem, size = 0x1000, scoped, tag = 'input window, operand 2, single buffered']
    #allocation10 [shape = 'u8[262144]{0}', space=vmem, size = 0x40000, scoped, tag = 'input window, operand 3, single buffered']
    #allocation11 [shape = 's32[1]{0}', space=sflag, size = 0x4, scoped, tag = 'scoped memory for tpu_custom_call.1']
    #allocation12 [shape = 'u8[65536]{0}', space=vmem, size = 0x10000, scoped, tag = 'output window, operand 0']
    #allocation13 [shape = 'u8[4096]{0}', space=vmem, size = 0x1000, scoped, tag = 'output window, operand 1, single buffered']
    #allocation14 [shape = 's32[1]{0}', space=sflag, size = 0x4, scoped, tag = 'scoped memory for tpu_custom_call.1']
    #allocation15 [shape = 'u8[4096]{0}', space=vmem, size = 0x1000, scoped, tag = 'output window, operand 2, single buffered']
    %12 = vsyncpa [#allocation5], 0
    %s13 = scalar_lea.sflag [#allocation5], 1
    %14 = vsyncpa %s13, 0
    %15 = vsyncpa [#allocation8], 0
    %16 = vsyncpa [#allocation11], 0
    %17 = vsyncpa [#allocation6], 0
    %s18 = scalar_lea.sflag [#allocation6], 1
    %19 = vsyncpa %s18, 0
    %20 = vsyncpa [#allocation14], 0
    loop: start=0, step=1, limit=4
    $region2: #{tpu_custom_call.1} parent=1 // loop_pre_header
      _
    $region3: #{tpu_custom_call.1} parent=1 // loop_header
      %s22 = sphi 0, %s26
      %p23 = scmp.ge.s32.totalorder %s22, 4
      %s32 = sphi 0, %s34
      %s35 = sphi 0, %s32
      %s36 = sphi 0, %s35
      %s52 = sphi 0, %s36
      %s56 = sphi 0, %s56
      %s58 = sphi 0, %s56
      %s59 = sphi 0, %s58
      %s73 = sphi 0, %s59
      %s77 = sphi 0, %s77
      %s79 = sphi 0, %s77
      %s80 = sphi 0, %s79
      %s94 = sphi 0, %s80
      %s98 = sphi 0, %s98
      %s100 = sphi 0, %s98
      %s101 = sphi 0, %s100
      %s115 = sphi 0, %s101
      %s121 = sphi 0, %s123
      %s124 = sphi 0, %s121
      %s125 = sphi 0, %s124
      %s141 = sphi 0, %s125
      %s145 = sphi 0, %s145
      %s147 = sphi 0, %s145
      %s148 = sphi 0, %s147
      %s162 = sphi 0, %s148
      %s166 = sphi 0, %s166
      %s168 = sphi 0, %s166
      %s169 = sphi 0, %s168
      %s183 = sphi 0, %s169
    $region4: #{tpu_custom_call.1} parent=1 // loop_header_branch
      %25 = sbr.rel (%p23) target = $region8
    $region5: #{tpu_custom_call.1} parent=1 // loop_body
      %s27 = ssub.s32 %s22, 1
      %s28 = ssub.s32 %s22, 2
      %s29 = sadd.s32 %s22, 1
      %s30 = ssub.s32 %s22, %s29
      %p31 = scmp.eq.s32.totalorder %s30, 0
      %s33 = sadd.s32 %s32, 1
      %s34 = scalar_select %p31, %s32, %s33
      %p37 = pneg %p31
      %p38 = scmp.eq.s32.totalorder %s22, 1
      %p39 = por %p37, %p38
      %p40 = scmp.ne.s32.totalorder %s32, %s35
      %p41 = scmp.eq.s32.totalorder %s22, 0
      %p42 = por %p40, %p41
      %p43 = scmp.ne.s32.totalorder %s32, %s35
      %p44 = scmp.eq.s32.totalorder %s27, 1
      %p45 = por %p43, %p44
      %p46 = scmp.ne.s32.totalorder %s35, %s36
      %p47 = scmp.eq.s32.totalorder %s27, 0
      %p48 = por %p46, %p47
      %p49 = scmp.ne.s32.totalorder %s35, %s36
      %p50 = scmp.eq.s32.totalorder %s28, 1
      %p51 = por %p49, %p50
      %p53 = scmp.ne.s32.totalorder %s36, %s52
      %p54 = scmp.eq.s32.totalorder %s28, 0
      %p55 = por %p53, %p54
      %s57 = sadd.s32 %s56, 1
      %p60 = scmp.eq.s32.totalorder %s22, 1
      %p61 = scmp.ne.s32.totalorder %s56, %s58
      %p62 = scmp.eq.s32.totalorder %s22, 0
      %p63 = por %p61, %p62
      %p64 = scmp.ne.s32.totalorder %s56, %s58
      %p65 = scmp.eq.s32.totalorder %s27, 1
      %p66 = por %p64, %p65
      %p67 = scmp.ne.s32.totalorder %s58, %s59
      %p68 = scmp.eq.s32.totalorder %s27, 0
      %p69 = por %p67, %p68
      %p70 = scmp.ne.s32.totalorder %s58, %s59
      %p71 = scmp.eq.s32.totalorder %s28, 1
      %p72 = por %p70, %p71
      %p74 = scmp.ne.s32.totalorder %s59, %s73
      %p75 = scmp.eq.s32.totalorder %s28, 0
      %p76 = por %p74, %p75
      %s78 = sadd.s32 %s77, 1
      %p81 = scmp.eq.s32.totalorder %s22, 1
      %p82 = scmp.ne.s32.totalorder %s77, %s79
      %p83 = scmp.eq.s32.totalorder %s22, 0
      %p84 = por %p82, %p83
      %p85 = scmp.ne.s32.totalorder %s77, %s79
      %p86 = scmp.eq.s32.totalorder %s27, 1
      %p87 = por %p85, %p86
      %p88 = scmp.ne.s32.totalorder %s79, %s80
      %p89 = scmp.eq.s32.totalorder %s27, 0
      %p90 = por %p88, %p89
      %p91 = scmp.ne.s32.totalorder %s79, %s80
      %p92 = scmp.eq.s32.totalorder %s28, 1
      %p93 = por %p91, %p92
      %p95 = scmp.ne.s32.totalorder %s80, %s94
      %p96 = scmp.eq.s32.totalorder %s28, 0
      %p97 = por %p95, %p96
      %s99 = sadd.s32 %s98, 1
      %p102 = scmp.eq.s32.totalorder %s22, 1
      %p103 = scmp.ne.s32.totalorder %s98, %s100
      %p104 = scmp.eq.s32.totalorder %s22, 0
      %p105 = por %p103, %p104
      %p106 = scmp.ne.s32.totalorder %s98, %s100
      %p107 = scmp.eq.s32.totalorder %s27, 1
      %p108 = por %p106, %p107
      %p109 = scmp.ne.s32.totalorder %s100, %s101
      %p110 = scmp.eq.s32.totalorder %s27, 0
      %p111 = por %p109, %p110
      %p112 = scmp.ne.s32.totalorder %s100, %s101
      %p113 = scmp.eq.s32.totalorder %s28, 1
      %p114 = por %p112, %p113
      %p116 = scmp.ne.s32.totalorder %s101, %s115
      %p117 = scmp.eq.s32.totalorder %s28, 0
      %p118 = por %p116, %p117
      %s119 = ssub.s32 %s22, %s29
      %p120 = scmp.eq.s32.totalorder %s119, 0
      %s122 = sadd.s32 %s121, 1
      %s123 = scalar_select %p120, %s121, %s122
      %p126 = pneg %p120
      %p127 = scmp.eq.s32.totalorder %s22, 1
      %p128 = por %p126, %p127
      %p129 = scmp.ne.s32.totalorder %s121, %s124
      %p130 = scmp.eq.s32.totalorder %s22, 0
      %p131 = por %p129, %p130
      %p132 = scmp.ne.s32.totalorder %s121, %s124
      %p133 = scmp.eq.s32.totalorder %s27, 1
      %p134 = por %p132, %p133
      %p135 = scmp.ne.s32.totalorder %s124, %s125
      %p136 = scmp.eq.s32.totalorder %s27, 0
      %p137 = por %p135, %p136
      %p138 = scmp.ne.s32.totalorder %s124, %s125
      %p139 = scmp.eq.s32.totalorder %s28, 1
      %p140 = por %p138, %p139
      %p142 = scmp.ne.s32.totalorder %s125, %s141
      %p143 = scmp.eq.s32.totalorder %s28, 0
      %p144 = por %p142, %p143
      %s146 = sadd.s32 %s145, 1
      %p149 = scmp.eq.s32.totalorder %s22, 1
      %p150 = scmp.ne.s32.totalorder %s145, %s147
      %p151 = scmp.eq.s32.totalorder %s22, 0
      %p152 = por %p150, %p151
      %p153 = scmp.ne.s32.totalorder %s145, %s147
      %p154 = scmp.eq.s32.totalorder %s27, 1
      %p155 = por %p153, %p154
      %p156 = scmp.ne.s32.totalorder %s147, %s148
      %p157 = scmp.eq.s32.totalorder %s27, 0
      %p158 = por %p156, %p157
      %p159 = scmp.ne.s32.totalorder %s147, %s148
      %p160 = scmp.eq.s32.totalorder %s28, 1
      %p161 = por %p159, %p160
      %p163 = scmp.ne.s32.totalorder %s148, %s162
      %p164 = scmp.eq.s32.totalorder %s28, 0
      %p165 = por %p163, %p164
      %s167 = sadd.s32 %s166, 1
      %p170 = scmp.eq.s32.totalorder %s22, 1
      %p171 = scmp.ne.s32.totalorder %s166, %s168
      %p172 = scmp.eq.s32.totalorder %s22, 0
      %p173 = por %p171, %p172
      %p174 = scmp.ne.s32.totalorder %s166, %s168
      %p175 = scmp.eq.s32.totalorder %s27, 1
      %p176 = por %p174, %p175
      %p177 = scmp.ne.s32.totalorder %s168, %s169
      %p178 = scmp.eq.s32.totalorder %s27, 0
      %p179 = por %p177, %p178
      %p180 = scmp.ne.s32.totalorder %s168, %s169
      %p181 = scmp.eq.s32.totalorder %s28, 1
      %p182 = por %p180, %p181
      %p184 = scmp.ne.s32.totalorder %s169, %s183
      %p185 = scmp.eq.s32.totalorder %s28, 0
      %p186 = por %p184, %p185
      %p187 = scmp.le.s32.totalorder 1, %s22
      %p188 = scmp.lt.s32.totalorder %s22, 3
      %p189 = pnand %p187, %p188
      %p190 = pneg %p189
      // Predicated region
      $region9: #{tpu_custom_call.1} parent=5 // pred_check
        _
      $region10: #{tpu_custom_call.1} parent=5 // pred_check_branch
        %192 = sbr.rel (%p189) target = $region12
      $region11: #{tpu_custom_call.1} parent=5 // pred_region
        %s193 = ssub.s32 %s22, 1
        // Predicated region
        $region13: #{tpu_custom_call.1} parent=11 // pred_check
          %p194 = pneg %p69
        $region14: #{tpu_custom_call.1} parent=11 // pred_check_branch
          %196 = sbr.rel (%p194) target = $region16
        $region15: #{tpu_custom_call.1} parent=11 // pred_region
          %s198 = ssub.s32 128, 128
          %199 = vsyncadd [#allocation8], %s198
          %s201 = sshll.u32 [#allocation7], 4
          %s202 = int_to_ptr.vmem [resolvable:$true] %s201
          %204 = dma.hbm_to_vmem [thread:$0]  %s1, 128, %s202, [#allocation8]
        $region16: #{tpu_custom_call.1} parent=11 // pred_fallthru
          _
        // Predicated region
        $region17: #{tpu_custom_call.1} parent=11 // pred_check
          %p205 = pneg %p90
        $region18: #{tpu_custom_call.1} parent=11 // pred_check_branch
          %207 = sbr.rel (%p205) target = $region20
        $region19: #{tpu_custom_call.1} parent=11 // pred_region
          %s209 = ssub.s32 128, 128
          %210 = vsyncadd [#allocation8], %s209
          %s212 = sshll.u32 [#allocation9], 4
          %s213 = int_to_ptr.vmem [resolvable:$true] %s212
          %215 = dma.hbm_to_vmem [thread:$0]  %s2, 128, %s213, [#allocation8]
        $region20: #{tpu_custom_call.1} parent=11 // pred_fallthru
          _
        // Predicated region
        $region21: #{tpu_custom_call.1} parent=11 // pred_check
          %p216 = pneg %p111
        $region22: #{tpu_custom_call.1} parent=11 // pred_check_branch
          %218 = sbr.rel (%p216) target = $region24
        $region23: #{tpu_custom_call.1} parent=11 // pred_region
          %s220 = ssub.s32 8192, 8192
          %221 = vsyncadd [#allocation11], %s220
          %s222 = sshll.u32 [#allocation10], 4
          %s223 = int_to_ptr.vmem [resolvable:$true] %s222
          %228 = dma.hbm_to_vmem [thread:$0]  %s3, 8192, %s223, [#allocation11], 512, 512, 32
        $region24: #{tpu_custom_call.1} parent=11 // pred_fallthru
          _
      $region12: #{tpu_custom_call.1} parent=5 // pred_fallthru
        _
      %p229 = scmp.lt.s32.totalorder %s22, 2
      // Predicated region
      $region25: #{tpu_custom_call.1} parent=5 // pred_check
        %p230 = pneg %p229
      $region26: #{tpu_custom_call.1} parent=5 // pred_check_branch
        %232 = sbr.rel (%p230) target = $region28
      $region27: #{tpu_custom_call.1} parent=5 // pred_region
        // Predicated region
        $region29: #{tpu_custom_call.1} parent=27 // pred_check
          %p233 = pneg %p42
        $region30: #{tpu_custom_call.1} parent=27 // pred_check_branch
          %235 = sbr.rel (%p233) target = $region32
        $region31: #{tpu_custom_call.1} parent=27 // pred_region
          %s236 = sand.u32 %s32, 1
          %s237 = scalar_lea.sflag [#allocation5], %s236
          %s238 = sand.u32 %s32, 1
          %s239 = smul.addr %s238, 256
          %s240 = scalar_lea.vmem [#allocation4], %s239
          %s241 = smul.u32 8, %s22
          %s243 = ssub.s32 4096, 4096
          %244 = vsyncadd %s237, %s243
          %s245 = smul.addr %s241, 4
          %s246 = smul.addr %s245, 128
          %s247 = scalar_lea.hbm %s0, %s246
          %s248 = sshll.u32 %s240, 4
          %s249 = int_to_ptr.vmem [resolvable:$true] %s248
          %254 = dma.hbm_to_vmem [thread:$0]  %s247, 4096, %s249, %s237, 512, 512, 32
        $region32: #{tpu_custom_call.1} parent=27 // pred_fallthru
          _
      $region28: #{tpu_custom_call.1} parent=5 // pred_fallthru
        _
      %p255 = scmp.le.s32.totalorder 1, %s22
      %p256 = scmp.lt.s32.totalorder %s22, 3
      %p257 = pnand %p255, %p256
      %p258 = pneg %p257
      // Predicated region
      $region33: #{tpu_custom_call.1} parent=5 // pred_check
        _
      $region34: #{tpu_custom_call.1} parent=5 // pred_check_branch
        %260 = sbr.rel (%p257) target = $region36
      $region35: #{tpu_custom_call.1} parent=5 // pred_region
        %s261 = ssub.s32 %s22, 1
        %s262 = sand.u32 %s35, 1
        %s263 = scalar_lea.sflag [#allocation5], %s262
        %s264 = sand.u32 %s35, 1
        %s265 = smul.addr %s264, 256
        %s266 = scalar_lea.vmem [#allocation4], %s265
        // Predicated region
        $region37: #{tpu_custom_call.1} parent=35 // pred_check
          %p267 = pneg %p48
        $region38: #{tpu_custom_call.1} parent=35 // pred_check_branch
          %269 = sbr.rel (%p267) target = $region40
        $region39: #{tpu_custom_call.1} parent=35 // pred_region
          %270 = dma.done %s263, 4096
        $region40: #{tpu_custom_call.1} parent=35 // pred_fallthru
          _
        // Predicated region
        $region41: #{tpu_custom_call.1} parent=35 // pred_check
          %p271 = pneg %p69
        $region42: #{tpu_custom_call.1} parent=35 // pred_check_branch
          %273 = sbr.rel (%p271) target = $region44
        $region43: #{tpu_custom_call.1} parent=35 // pred_region
          %274 = dma.done [#allocation8], 128
        $region44: #{tpu_custom_call.1} parent=35 // pred_fallthru
          _
        // Predicated region
        $region45: #{tpu_custom_call.1} parent=35 // pred_check
          %p275 = pneg %p90
        $region46: #{tpu_custom_call.1} parent=35 // pred_check_branch
          %277 = sbr.rel (%p275) target = $region48
        $region47: #{tpu_custom_call.1} parent=35 // pred_region
          %278 = dma.done [#allocation8], 128
        $region48: #{tpu_custom_call.1} parent=35 // pred_fallthru
          _
        // Predicated region
        $region49: #{tpu_custom_call.1} parent=35 // pred_check
          %p279 = pneg %p111
        $region50: #{tpu_custom_call.1} parent=35 // pred_check_branch
          %281 = sbr.rel (%p279) target = $region52
        $region51: #{tpu_custom_call.1} parent=35 // pred_region
          %282 = dma.done [#allocation11], 8192
        $region52: #{tpu_custom_call.1} parent=35 // pred_fallthru
          _
        %s283 = sand.u32 %s35, 1
        %s284 = scalar_lea.sflag [#allocation5], %s283
        %s285 = sand.u32 %s35, 1
        %s286 = smul.addr %s285, 256
        %s287 = scalar_lea.vmem [#allocation4], %s286
        %p288 = pneg %p48
        %p289 = pneg %p45
        %p290 = pneg %p69
        %p291 = pneg %p66
        %p292 = pneg %p90
        %p293 = pneg %p87
        %p294 = pneg %p111
        %p295 = pneg %p108
        %p296 = pneg %p137
        %p297 = pneg %p134
        %s298 = sand.u32 %s124, 1
        %s299 = scalar_lea.sflag [#allocation6], %s298
        %s300 = sand.u32 %s124, 1
        %s301 = smul.addr %s300, 64
        %s302 = scalar_lea.vmem [#allocation12], %s301
        %p303 = pneg %p158
        %p304 = pneg %p155
        %p305 = pneg %p179
        %p306 = pneg %p176
        %s307 = smul.u32 8, %s27
        %s308 = smul.u32 8, %s27
        %p309 = scmp.eq.s32.totalorder %s27, 0
        // Predicated region
        $region53: #{tpu_custom_call.1} parent=35 // pred_check
          %p310 = pneg %p309
        $region54: #{tpu_custom_call.1} parent=35 // pred_check_branch
          %312 = sbr.rel (%p310) target = $region56
        $region55: #{tpu_custom_call.1} parent=35 // pred_region
          %v313 = vld [vmem:[#allocation7] sm:$0xff]
          %314 = vst [vmem:[#allocation2] sm:$0xff] %v313
          %v315 = vld [vmem:[#allocation9] sm:$0xff]
          %316 = vst [vmem:[#allocation3] sm:$0xff] %v315
        $region56: #{tpu_custom_call.1} parent=35 // pred_fallthru
          _
        %v317 = vld [vmem:[#allocation10] sm:$0xff]
        %v318 = vld [vmem:[#allocation10 + $0x8] sm:$0xff]
        %v319 = vld [vmem:[#allocation10 + $0x10] sm:$0xff]
        %v320 = vld [vmem:[#allocation10 + $0x18] sm:$0xff]
        %v321 = vld [vmem:[#allocation10 + $0x20] sm:$0xff]
        %v322 = vld [vmem:[#allocation10 + $0x28] sm:$0xff]
        %v323 = vld [vmem:[#allocation10 + $0x30] sm:$0xff]
        %v324 = vld [vmem:[#allocation10 + $0x38] sm:$0xff]
        %v325 = vld [vmem:[#allocation10 + $0x40] sm:$0xff]
        %v326 = vld [vmem:[#allocation10 + $0x48] sm:$0xff]
        %v327 = vld [vmem:[#allocation10 + $0x50] sm:$0xff]
        %v328 = vld [vmem:[#allocation10 + $0x58] sm:$0xff]
        %v329 = vld [vmem:[#allocation10 + $0x60] sm:$0xff]
        %v330 = vld [vmem:[#allocation10 + $0x68] sm:$0xff]
        %v331 = vld [vmem:[#allocation10 + $0x70] sm:$0xff]
        %v332 = vld [vmem:[#allocation10 + $0x78] sm:$0xff]
        %v333 = vld [vmem:[#allocation10 + $0x80] sm:$0xff]
        %v334 = vld [vmem:[#allocation10 + $0x88] sm:$0xff]
        %v335 = vld [vmem:[#allocation10 + $0x90] sm:$0xff]
        %v336 = vld [vmem:[#allocation10 + $0x98] sm:$0xff]
        %v337 = vld [vmem:[#allocation10 + $0xa0] sm:$0xff]
        %v338 = vld [vmem:[#allocation10 + $0xa8] sm:$0xff]
        %v339 = vld [vmem:[#allocation10 + $0xb0] sm:$0xff]
        %v340 = vld [vmem:[#allocation10 + $0xb8] sm:$0xff]
        %v341 = vld [vmem:[#allocation10 + $0xc0] sm:$0xff]
        %v342 = vld [vmem:[#allocation10 + $0xc8] sm:$0xff]
        %v343 = vld [vmem:[#allocation10 + $0xd0] sm:$0xff]
        %v344 = vld [vmem:[#allocation10 + $0xd8] sm:$0xff]
        %v345 = vld [vmem:[#allocation10 + $0xe0] sm:$0xff]
        %v346 = vld [vmem:[#allocation10 + $0xe8] sm:$0xff]
        %v347 = vld [vmem:[#allocation10 + $0xf0] sm:$0xff]
        %v348 = vld [vmem:[#allocation10 + $0xf8] sm:$0xff]
        %v349 = vld [vmem:[#allocation10 + $0x100] sm:$0xff]
        %v350 = vld [vmem:[#allocation10 + $0x108] sm:$0xff]
        %v351 = vld [vmem:[#allocation10 + $0x110] sm:$0xff]
        %v352 = vld [vmem:[#allocation10 + $0x118] sm:$0xff]
        %v353 = vld [vmem:[#allocation10 + $0x120] sm:$0xff]
        %v354 = vld [vmem:[#allocation10 + $0x128] sm:$0xff]
        %v355 = vld [vmem:[#allocation10 + $0x130] sm:$0xff]
        %v356 = vld [vmem:[#allocation10 + $0x138] sm:$0xff]
        %v357 = vld [vmem:[#allocation10 + $0x140] sm:$0xff]
        %v358 = vld [vmem:[#allocation10 + $0x148] sm:$0xff]
        %v359 = vld [vmem:[#allocation10 + $0x150] sm:$0xff]
        %v360 = vld [vmem:[#allocation10 + $0x158] sm:$0xff]
        %v361 = vld [vmem:[#allocation10 + $0x160] sm:$0xff]
        %v362 = vld [vmem:[#allocation10 + $0x168] sm:$0xff]
        %v363 = vld [vmem:[#allocation10 + $0x170] sm:$0xff]
        %v364 = vld [vmem:[#allocation10 + $0x178] sm:$0xff]
        %v365 = vld [vmem:[#allocation10 + $0x180] sm:$0xff]
        %v366 = vld [vmem:[#allocation10 + $0x188] sm:$0xff]
        %v367 = vld [vmem:[#allocation10 + $0x190] sm:$0xff]
        %v368 = vld [vmem:[#allocation10 + $0x198] sm:$0xff]
        %v369 = vld [vmem:[#allocation10 + $0x1a0] sm:$0xff]
        %v370 = vld [vmem:[#allocation10 + $0x1a8] sm:$0xff]
        %v371 = vld [vmem:[#allocation10 + $0x1b0] sm:$0xff]
        %v372 = vld [vmem:[#allocation10 + $0x1b8] sm:$0xff]
        %v373 = vld [vmem:[#allocation10 + $0x1c0] sm:$0xff]
        %v374 = vld [vmem:[#allocation10 + $0x1c8] sm:$0xff]
        %v375 = vld [vmem:[#allocation10 + $0x1d0] sm:$0xff]
        %v376 = vld [vmem:[#allocation10 + $0x1d8] sm:$0xff]
        %v377 = vld [vmem:[#allocation10 + $0x1e0] sm:$0xff]
        %v378 = vld [vmem:[#allocation10 + $0x1e8] sm:$0xff]
        %v379 = vld [vmem:[#allocation10 + $0x1f0] sm:$0xff]
        %v380 = vld [vmem:[#allocation10 + $0x1f8] sm:$0xff]
        %v381 = vld [vmem:[#allocation2] sm:$0xff]
        %v382 = vld [vmem:[#allocation3] sm:$0xff]
        %v383 = vld [vmem:[%s266] sm:$0xff]
        %v384 = vld [vmem:[%s266 + $0x8] sm:$0xff]
        %v385 = vld [vmem:[%s266 + $0x10] sm:$0xff]
        %v386 = vld [vmem:[%s266 + $0x18] sm:$0xff]
        %387 = vmatprep.subr.mxu0 %v318
        %388 = vmatpush1.msra.mxu0 %v317
        %389 = vmatprep.subr.mxu0 %v322
        %390 = vmatpush1.msra.mxu0 %v321
        %391 = vmatprep.subr.mxu0 %v326
        %392 = vmatpush1.msra.mxu0 %v325
        %393 = vmatprep.subr.mxu0 %v330
        %394 = vmatpush1.msra.mxu0 %v329
        %395 = vmatprep.subr.mxu0 %v334
        %396 = vmatpush1.msra.mxu0 %v333
        %397 = vmatprep.subr.mxu0 %v338
        %398 = vmatpush1.msra.mxu0 %v337
        %399 = vmatprep.subr.mxu0 %v342
        %400 = vmatpush1.msra.mxu0 %v341
        %401 = vmatprep.subr.mxu0 %v346
        %402 = vmatpush1.msra.mxu0 %v345
        %403 = vmatprep.subr.mxu0 %v350
        %404 = vmatpush1.msra.mxu0 %v349
        %405 = vmatprep.subr.mxu0 %v354
        %406 = vmatpush1.msra.mxu0 %v353
        %407 = vmatprep.subr.mxu0 %v358
        %408 = vmatpush1.msra.mxu0 %v357
        %409 = vmatprep.subr.mxu0 %v362
        %410 = vmatpush1.msra.mxu0 %v361
        %411 = vmatprep.subr.mxu0 %v366
        %412 = vmatpush1.msra.mxu0 %v365
        %413 = vmatprep.subr.mxu0 %v370
        %414 = vmatpush1.msra.mxu0 %v369
        %415 = vmatprep.subr.mxu0 %v374
        %416 = vmatpush1.msra.mxu0 %v373
        %417 = vmatprep.subr.mxu0 %v378
        %418 = vmatpush1.msra.mxu0 %v377
        %419 = vmatprep.subr.mxu0 0.0
        %420 = vmatpush1.msra.mxu0 0.0
        %421 = vmatprep.subr.mxu0 0.0
        %422 = vmatpush1.msra.mxu0 0.0
        %423 = vmatprep.subr.mxu0 0.0
        %424 = vmatpush1.msra.mxu0 0.0
        %425 = vmatprep.subr.mxu0 0.0
        %426 = vmatpush1.msra.mxu0 0.0
        %427 = vmatprep.subr.mxu0 0.0
        %428 = vmatpush1.msra.mxu0 0.0
        %429 = vmatprep.subr.mxu0 0.0
        %430 = vmatpush1.msra.mxu0 0.0
        %431 = vmatprep.subr.mxu0 0.0
        %432 = vmatpush1.msra.mxu0 0.0
        %433 = vmatprep.subr.mxu0 0.0
        %434 = vmatpush1.msra.mxu0 0.0
        %435 = vmatprep.subr.mxu0 0.0
        %436 = vmatpush1.msra.mxu0 0.0
        %437 = vmatprep.subr.mxu0 0.0
        %438 = vmatpush1.msra.mxu0 0.0
        %439 = vmatprep.subr.mxu0 0.0
        %440 = vmatpush1.msra.mxu0 0.0
        %441 = vmatprep.subr.mxu0 0.0
        %442 = vmatpush1.msra.mxu0 0.0
        %443 = vmatprep.subr.mxu0 0.0
        %444 = vmatpush1.msra.mxu0 0.0
        %445 = vmatprep.subr.mxu0 0.0
        %446 = vmatpush1.msra.mxu0 0.0
        %447 = vmatprep.subr.mxu0 0.0
        %448 = vmatpush1.msra.mxu0 0.0
        %449 = vmatprep.subr.mxu0 0.0
        %450 = vmatpush1.msra.mxu0 0.0
        %451 = vmatprep.mubr.f32.mxu0 0.0
        %452 = vmatmul.mubr.f32.gmra.mrb[0].mxu0 %v381
        %v453 = vpop.f32.mrb[0].mxu0
        %v454 = vadd.f32 0.0, %v453
        %v455 = vpop.f32.mrb[0].mxu0
        %v456 = vadd.f32 0.0, %v455
        %457 = vdwg.mxu0
        %458 = vmatprep.subr.mxu0 %v320
        %459 = vmatpush1.msra.mxu0 %v319
        %460 = vmatprep.subr.mxu0 %v324
        %461 = vmatpush1.msra.mxu0 %v323
        %462 = vmatprep.subr.mxu0 %v328
        %463 = vmatpush1.msra.mxu0 %v327
        %464 = vmatprep.subr.mxu0 %v332
        %465 = vmatpush1.msra.mxu0 %v331
        %466 = vmatprep.subr.mxu0 %v336
        %467 = vmatpush1.msra.mxu0 %v335
        %468 = vmatprep.subr.mxu0 %v340
        %469 = vmatpush1.msra.mxu0 %v339
        %470 = vmatprep.subr.mxu0 %v344
        %471 = vmatpush1.msra.mxu0 %v343
        %472 = vmatprep.subr.mxu0 %v348
        %473 = vmatpush1.msra.mxu0 %v347
        %474 = vmatprep.subr.mxu0 %v352
        %475 = vmatpush1.msra.mxu0 %v351
        %476 = vmatprep.subr.mxu0 %v356
        %477 = vmatpush1.msra.mxu0 %v355
        %478 = vmatprep.subr.mxu0 %v360
        %479 = vmatpush1.msra.mxu0 %v359
        %480 = vmatprep.subr.mxu0 %v364
        %481 = vmatpush1.msra.mxu0 %v363
        %482 = vmatprep.subr.mxu0 %v368
        %483 = vmatpush1.msra.mxu0 %v367
        %484 = vmatprep.subr.mxu0 %v372
        %485 = vmatpush1.msra.mxu0 %v371
        %486 = vmatprep.subr.mxu0 %v376
        %487 = vmatpush1.msra.mxu0 %v375
        %488 = vmatprep.subr.mxu0 %v380
        %489 = vmatpush1.msra.mxu0 %v379
        %490 = vmatprep.subr.mxu0 0.0
        %491 = vmatpush1.msra.mxu0 0.0
        %492 = vmatprep.subr.mxu0 0.0
        %493 = vmatpush1.msra.mxu0 0.0
        %494 = vmatprep.subr.mxu0 0.0
        %495 = vmatpush1.msra.mxu0 0.0
        %496 = vmatprep.subr.mxu0 0.0
        %497 = vmatpush1.msra.mxu0 0.0
        %498 = vmatprep.subr.mxu0 0.0
        %499 = vmatpush1.msra.mxu0 0.0
        %500 = vmatprep.subr.mxu0 0.0
        %501 = vmatpush1.msra.mxu0 0.0
        %502 = vmatprep.subr.mxu0 0.0
        %503 = vmatpush1.msra.mxu0 0.0
        %504 = vmatprep.subr.mxu0 0.0
        %505 = vmatpush1.msra.mxu0 0.0
        %506 = vmatprep.subr.mxu0 0.0
        %507 = vmatpush1.msra.mxu0 0.0
        %508 = vmatprep.subr.mxu0 0.0
        %509 = vmatpush1.msra.mxu0 0.0
        %510 = vmatprep.subr.mxu0 0.0
        %511 = vmatpush1.msra.mxu0 0.0
        %512 = vmatprep.subr.mxu0 0.0
        %513 = vmatpush1.msra.mxu0 0.0
        %514 = vmatprep.subr.mxu0 0.0
        %515 = vmatpush1.msra.mxu0 0.0
        %516 = vmatprep.subr.mxu0 0.0
        %517 = vmatpush1.msra.mxu0 0.0
        %518 = vmatprep.subr.mxu0 0.0
        %519 = vmatpush1.msra.mxu0 0.0
        %520 = vmatprep.subr.mxu0 0.0
        %521 = vmatpush1.msra.mxu0 0.0
        %522 = vmatprep.mubr.f32.mxu0 0.0
        %523 = vmatmul.mubr.f32.gmra.mrb[0].mxu0 %v381
        %v524 = vpop.f32.mrb[0].mxu0
        %v525 = vadd.f32 0.0, %v524
        %v526 = vpop.f32.mrb[0].mxu0
        %v527 = vadd.f32 0.0, %v526
        %528 = vdwg.mxu0
        %v529 = vadd.f32 %v383, %v454
        %v530 = vadd.f32 %v384, %v456
        %v531 = vadd.f32 %v385, %v525
        %v532 = vadd.f32 %v386, %v527
        %v533 = vxor.u32 %v529, 2147483648
        %v534 = vmul.f32 %v533, 1.442695
        %v535 = vpow.pop %v534
        %v536 = vadd.f32 %v535, 1.0
        %v537 = vrcp.pop %v536
        %v538 = vmul.f32 1.0, %v537
        %v539 = vxor.u32 %v530, 2147483648
        %v540 = vmul.f32 %v539, 1.442695
        %v541 = vpow.pop %v540
        %v542 = vadd.f32 %v541, 1.0
        %v543 = vrcp.pop %v542
        %v544 = vmul.f32 1.0, %v543
        %v545 = vtanh.pop %v531
        %v546 = vxor.u32 %v532, 2147483648
        %v547 = vmul.f32 %v546, 1.442695
        %v548 = vpow.pop %v547
        %v549 = vadd.f32 %v548, 1.0
        %v550 = vrcp.pop %v549
        %v551 = vmul.f32 1.0, %v550
        %v552 = vmul.f32 %v544, %v382
        %v553 = vmul.f32 %v538, %v545
        %v554 = vadd.f32 %v552, %v553
        %v555 = vtanh.pop %v554
        %v556 = vmul.f32 %v551, %v555
        %557 = vst [vmem:[%s302] sm:$0xff] %v556
        %s558 = scalar_lea.vmem %s266, 32 [#allocation4]
        %v559 = vld [vmem:[%s558] sm:$0xff]
        %v560 = vld [vmem:[%s558 + $0x8] sm:$0xff]
        %v561 = vld [vmem:[%s558 + $0x10] sm:$0xff]
        %v562 = vld [vmem:[%s558 + $0x18] sm:$0xff]
        %563 = vmatprep.subr.mxu0 %v318
        %564 = vmatpush1.msra.mxu0 %v317
        %565 = vmatprep.subr.mxu0 %v322
        %566 = vmatpush1.msra.mxu0 %v321
        %567 = vmatprep.subr.mxu0 %v326
        %568 = vmatpush1.msra.mxu0 %v325
        %569 = vmatprep.subr.mxu0 %v330
        %570 = vmatpush1.msra.mxu0 %v329
        %571 = vmatprep.subr.mxu0 %v334
        %572 = vmatpush1.msra.mxu0 %v333
        %573 = vmatprep.subr.mxu0 %v338
        %574 = vmatpush1.msra.mxu0 %v337
        %575 = vmatprep.subr.mxu0 %v342
        %576 = vmatpush1.msra.mxu0 %v341
        %577 = vmatprep.subr.mxu0 %v346
        %578 = vmatpush1.msra.mxu0 %v345
        %579 = vmatprep.subr.mxu0 %v350
        %580 = vmatpush1.msra.mxu0 %v349
        %581 = vmatprep.subr.mxu0 %v354
        %582 = vmatpush1.msra.mxu0 %v353
        %583 = vmatprep.subr.mxu0 %v358
        %584 = vmatpush1.msra.mxu0 %v357
        %585 = vmatprep.subr.mxu0 %v362
        %586 = vmatpush1.msra.mxu0 %v361
        %587 = vmatprep.subr.mxu0 %v366
        %588 = vmatpush1.msra.mxu0 %v365
        %589 = vmatprep.subr.mxu0 %v370
        %590 = vmatpush1.msra.mxu0 %v369
        %591 = vmatprep.subr.mxu0 %v374
        %592 = vmatpush1.msra.mxu0 %v373
        %593 = vmatprep.subr.mxu0 %v378
        %594 = vmatpush1.msra.mxu0 %v377
        %595 = vmatprep.subr.mxu0 0.0
        %596 = vmatpush1.msra.mxu0 0.0
        %597 = vmatprep.subr.mxu0 0.0
        %598 = vmatpush1.msra.mxu0 0.0
        %599 = vmatprep.subr.mxu0 0.0
        %600 = vmatpush1.msra.mxu0 0.0
        %601 = vmatprep.subr.mxu0 0.0
        %602 = vmatpush1.msra.mxu0 0.0
        %603 = vmatprep.subr.mxu0 0.0
        %604 = vmatpush1.msra.mxu0 0.0
        %605 = vmatprep.subr.mxu0 0.0
        %606 = vmatpush1.msra.mxu0 0.0
        %607 = vmatprep.subr.mxu0 0.0
        %608 = vmatpush1.msra.mxu0 0.0
        %609 = vmatprep.subr.mxu0 0.0
        %610 = vmatpush1.msra.mxu0 0.0
        %611 = vmatprep.subr.mxu0 0.0
        %612 = vmatpush1.msra.mxu0 0.0
        %613 = vmatprep.subr.mxu0 0.0
        %614 = vmatpush1.msra.mxu0 0.0
        %615 = vmatprep.subr.mxu0 0.0
        %616 = vmatpush1.msra.mxu0 0.0
        %617 = vmatprep.subr.mxu0 0.0
        %618 = vmatpush1.msra.mxu0 0.0
        %619 = vmatprep.subr.mxu0 0.0
        %620 = vmatpush1.msra.mxu0 0.0
        %621 = vmatprep.subr.mxu0 0.0
        %622 = vmatpush1.msra.mxu0 0.0
        %623 = vmatprep.subr.mxu0 0.0
        %624 = vmatpush1.msra.mxu0 0.0
        %625 = vmatprep.subr.mxu0 0.0
        %626 = vmatpush1.msra.mxu0 0.0
        %627 = vmatprep.mubr.f32.mxu0 0.0
        %628 = vmatmul.mubr.f32.gmra.mrb[0].mxu0 %v556
        %v629 = vpop.f32.mrb[0].mxu0
        %v630 = vadd.f32 0.0, %v629
        %v631 = vpop.f32.mrb[0].mxu0
        %v632 = vadd.f32 0.0, %v631
        %633 = vdwg.mxu0
        %634 = vmatprep.subr.mxu0 %v320
        %635 = vmatpush1.msra.mxu0 %v319
        %636 = vmatprep.subr.mxu0 %v324
        %637 = vmatpush1.msra.mxu0 %v323
        %638 = vmatprep.subr.mxu0 %v328
        %639 = vmatpush1.msra.mxu0 %v327
        %640 = vmatprep.subr.mxu0 %v332
        %641 = vmatpush1.msra.mxu0 %v331
        %642 = vmatprep.subr.mxu0 %v336
        %643 = vmatpush1.msra.mxu0 %v335
        %644 = vmatprep.subr.mxu0 %v340
        %645 = vmatpush1.msra.mxu0 %v339
        %646 = vmatprep.subr.mxu0 %v344
        %647 = vmatpush1.msra.mxu0 %v343
        %648 = vmatprep.subr.mxu0 %v348
        %649 = vmatpush1.msra.mxu0 %v347
        %650 = vmatprep.subr.mxu0 %v352
        %651 = vmatpush1.msra.mxu0 %v351
        %652 = vmatprep.subr.mxu0 %v356
        %653 = vmatpush1.msra.mxu0 %v355
        %654 = vmatprep.subr.mxu0 %v360
        %655 = vmatpush1.msra.mxu0 %v359
        %656 = vmatprep.subr.mxu0 %v364
        %657 = vmatpush1.msra.mxu0 %v363
        %658 = vmatprep.subr.mxu0 %v368
        %659 = vmatpush1.msra.mxu0 %v367
        %660 = vmatprep.subr.mxu0 %v372
        %661 = vmatpush1.msra.mxu0 %v371
        %662 = vmatprep.subr.mxu0 %v376
        %663 = vmatpush1.msra.mxu0 %v375
        %664 = vmatprep.subr.mxu0 %v380
        %665 = vmatpush1.msra.mxu0 %v379
        %666 = vmatprep.subr.mxu0 0.0
        %667 = vmatpush1.msra.mxu0 0.0
        %668 = vmatprep.subr.mxu0 0.0
        %669 = vmatpush1.msra.mxu0 0.0
        %670 = vmatprep.subr.mxu0 0.0
        %671 = vmatpush1.msra.mxu0 0.0
        %672 = vmatprep.subr.mxu0 0.0
        %673 = vmatpush1.msra.mxu0 0.0
        %674 = vmatprep.subr.mxu0 0.0
        %675 = vmatpush1.msra.mxu0 0.0
        %676 = vmatprep.subr.mxu0 0.0
        %677 = vmatpush1.msra.mxu0 0.0
        %678 = vmatprep.subr.mxu0 0.0
        %679 = vmatpush1.msra.mxu0 0.0
        %680 = vmatprep.subr.mxu0 0.0
        %681 = vmatpush1.msra.mxu0 0.0
        %682 = vmatprep.subr.mxu0 0.0
        %683 = vmatpush1.msra.mxu0 0.0
        %684 = vmatprep.subr.mxu0 0.0
        %685 = vmatpush1.msra.mxu0 0.0
        %686 = vmatprep.subr.mxu0 0.0
        %687 = vmatpush1.msra.mxu0 0.0
        %688 = vmatprep.subr.mxu0 0.0
        %689 = vmatpush1.msra.mxu0 0.0
        %690 = vmatprep.subr.mxu0 0.0
        %691 = vmatpush1.msra.mxu0 0.0
        %692 = vmatprep.subr.mxu0 0.0
        %693 = vmatpush1.msra.mxu0 0.0
        %694 = vmatprep.subr.mxu0 0.0
        %695 = vmatpush1.msra.mxu0 0.0
        %696 = vmatprep.subr.mxu0 0.0
        %697 = vmatpush1.msra.mxu0 0.0
        %698 = vmatprep.mubr.f32.mxu0 0.0
        %699 = vmatmul.mubr.f32.gmra.mrb[0].mxu0 %v556
        %v700 = vpop.f32.mrb[0].mxu0
        %v701 = vadd.f32 0.0, %v700
        %v702 = vpop.f32.mrb[0].mxu0
        %v703 = vadd.f32 0.0, %v702
        %704 = vdwg.mxu0
        %v705 = vadd.f32 %v559, %v630
        %v706 = vadd.f32 %v560, %v632
        %v707 = vadd.f32 %v561, %v701
        %v708 = vadd.f32 %v562, %v703
        %v709 = vxor.u32 %v705, 2147483648
        %v710 = vmul.f32 %v709, 1.442695
        %v711 = vpow.pop %v710
        %v712 = vadd.f32 %v711, 1.0
        %v713 = vrcp.pop %v712
        %v714 = vmul.f32 1.0, %v713
        %v715 = vxor.u32 %v706, 2147483648
        %v716 = vmul.f32 %v715, 1.442695
        %v717 = vpow.pop %v716
        %v718 = vadd.f32 %v717, 1.0
        %v719 = vrcp.pop %v718
        %v720 = vmul.f32 1.0, %v719
        %v721 = vtanh.pop %v707
        %v722 = vxor.u32 %v708, 2147483648
        %v723 = vmul.f32 %v722, 1.442695
        %v724 = vpow.pop %v723
        %v725 = vadd.f32 %v724, 1.0
        %v726 = vrcp.pop %v725
        %v727 = vmul.f32 1.0, %v726
        %v728 = vmul.f32 %v720, %v554
        %v729 = vmul.f32 %v714, %v721
        %v730 = vadd.f32 %v728, %v729
        %v731 = vtanh.pop %v730
        %v732 = vmul.f32 %v727, %v731
        %s733 = scalar_lea.vmem %s302, 8 [#allocation12]
        %734 = vst [vmem:[%s733] sm:$0xff] %v732
        %s735 = scalar_lea.vmem %s266, 64 [#allocation4]
        %v736 = vld [vmem:[%s735] sm:$0xff]
        %v737 = vld [vmem:[%s735 + $0x8] sm:$0xff]
        %v738 = vld [vmem:[%s735 + $0x10] sm:$0xff]
        %v739 = vld [vmem:[%s735 + $0x18] sm:$0xff]
        %740 = vmatprep.subr.mxu0 %v318
        %741 = vmatpush1.msra.mxu0 %v317
        %742 = vmatprep.subr.mxu0 %v322
        %743 = vmatpush1.msra.mxu0 %v321
        %744 = vmatprep.subr.mxu0 %v326
        %745 = vmatpush1.msra.mxu0 %v325
        %746 = vmatprep.subr.mxu0 %v330
        %747 = vmatpush1.msra.mxu0 %v329
        %748 = vmatprep.subr.mxu0 %v334
        %749 = vmatpush1.msra.mxu0 %v333
        %750 = vmatprep.subr.mxu0 %v338
        %751 = vmatpush1.msra.mxu0 %v337
        %752 = vmatprep.subr.mxu0 %v342
        %753 = vmatpush1.msra.mxu0 %v341
        %754 = vmatprep.subr.mxu0 %v346
        %755 = vmatpush1.msra.mxu0 %v345
        %756 = vmatprep.subr.mxu0 %v350
        %757 = vmatpush1.msra.mxu0 %v349
        %758 = vmatprep.subr.mxu0 %v354
        %759 = vmatpush1.msra.mxu0 %v353
        %760 = vmatprep.subr.mxu0 %v358
        %761 = vmatpush1.msra.mxu0 %v357
        %762 = vmatprep.subr.mxu0 %v362
        %763 = vmatpush1.msra.mxu0 %v361
        %764 = vmatprep.subr.mxu0 %v366
        %765 = vmatpush1.msra.mxu0 %v365
        %766 = vmatprep.subr.mxu0 %v370
        %767 = vmatpush1.msra.mxu0 %v369
        %768 = vmatprep.subr.mxu0 %v374
        %769 = vmatpush1.msra.mxu0 %v373
        %770 = vmatprep.subr.mxu0 %v378
        %771 = vmatpush1.msra.mxu0 %v377
        %772 = vmatprep.subr.mxu0 0.0
        %773 = vmatpush1.msra.mxu0 0.0
        %774 = vmatprep.subr.mxu0 0.0
        %775 = vmatpush1.msra.mxu0 0.0
        %776 = vmatprep.subr.mxu0 0.0
        %777 = vmatpush1.msra.mxu0 0.0
        %778 = vmatprep.subr.mxu0 0.0
        %779 = vmatpush1.msra.mxu0 0.0
        %780 = vmatprep.subr.mxu0 0.0
        %781 = vmatpush1.msra.mxu0 0.0
        %782 = vmatprep.subr.mxu0 0.0
        %783 = vmatpush1.msra.mxu0 0.0
        %784 = vmatprep.subr.mxu0 0.0
        %785 = vmatpush1.msra.mxu0 0.0
        %786 = vmatprep.subr.mxu0 0.0
        %787 = vmatpush1.msra.mxu0 0.0
        %788 = vmatprep.subr.mxu0 0.0
        %789 = vmatpush1.msra.mxu0 0.0
        %790 = vmatprep.subr.mxu0 0.0
        %791 = vmatpush1.msra.mxu0 0.0
        %792 = vmatprep.subr.mxu0 0.0
        %793 = vmatpush1.msra.mxu0 0.0
        %794 = vmatprep.subr.mxu0 0.0
        %795 = vmatpush1.msra.mxu0 0.0
        %796 = vmatprep.subr.mxu0 0.0
        %797 = vmatpush1.msra.mxu0 0.0
        %798 = vmatprep.subr.mxu0 0.0
        %799 = vmatpush1.msra.mxu0 0.0
        %800 = vmatprep.subr.mxu0 0.0
        %801 = vmatpush1.msra.mxu0 0.0
        %802 = vmatprep.subr.mxu0 0.0
        %803 = vmatpush1.msra.mxu0 0.0
        %804 = vmatprep.mubr.f32.mxu0 0.0
        %805 = vmatmul.mubr.f32.gmra.mrb[0].mxu0 %v732
        %v806 = vpop.f32.mrb[0].mxu0
        %v807 = vadd.f32 0.0, %v806
        %v808 = vpop.f32.mrb[0].mxu0
        %v809 = vadd.f32 0.0, %v808
        %810 = vdwg.mxu0
        %811 = vmatprep.subr.mxu0 %v320
        %812 = vmatpush1.msra.mxu0 %v319
        %813 = vmatprep.subr.mxu0 %v324
        %814 = vmatpush1.msra.mxu0 %v323
        %815 = vmatprep.subr.mxu0 %v328
        %816 = vmatpush1.msra.mxu0 %v327
        %817 = vmatprep.subr.mxu0 %v332
        %818 = vmatpush1.msra.mxu0 %v331
        %819 = vmatprep.subr.mxu0 %v336
        %820 = vmatpush1.msra.mxu0 %v335
        %821 = vmatprep.subr.mxu0 %v340
        %822 = vmatpush1.msra.mxu0 %v339
        %823 = vmatprep.subr.mxu0 %v344
        %824 = vmatpush1.msra.mxu0 %v343
        %825 = vmatprep.subr.mxu0 %v348
        %826 = vmatpush1.msra.mxu0 %v347
        %827 = vmatprep.subr.mxu0 %v352
        %828 = vmatpush1.msra.mxu0 %v351
        %829 = vmatprep.subr.mxu0 %v356
        %830 = vmatpush1.msra.mxu0 %v355
        %831 = vmatprep.subr.mxu0 %v360
        %832 = vmatpush1.msra.mxu0 %v359
        %833 = vmatprep.subr.mxu0 %v364
        %834 = vmatpush1.msra.mxu0 %v363
        %835 = vmatprep.subr.mxu0 %v368
        %836 = vmatpush1.msra.mxu0 %v367
        %837 = vmatprep.subr.mxu0 %v372
        %838 = vmatpush1.msra.mxu0 %v371
        %839 = vmatprep.subr.mxu0 %v376
        %840 = vmatpush1.msra.mxu0 %v375
        %841 = vmatprep.subr.mxu0 %v380
        %842 = vmatpush1.msra.mxu0 %v379
        %843 = vmatprep.subr.mxu0 0.0
        %844 = vmatpush1.msra.mxu0 0.0
        %845 = vmatprep.subr.mxu0 0.0
        %846 = vmatpush1.msra.mxu0 0.0
        %847 = vmatprep.subr.mxu0 0.0
        %848 = vmatpush1.msra.mxu0 0.0
        %849 = vmatprep.subr.mxu0 0.0
        %850 = vmatpush1.msra.mxu0 0.0
        %851 = vmatprep.subr.mxu0 0.0
        %852 = vmatpush1.msra.mxu0 0.0
        %853 = vmatprep.subr.mxu0 0.0
        %854 = vmatpush1.msra.mxu0 0.0
        %855 = vmatprep.subr.mxu0 0.0
        %856 = vmatpush1.msra.mxu0 0.0
        %857 = vmatprep.subr.mxu0 0.0
        %858 = vmatpush1.msra.mxu0 0.0
        %859 = vmatprep.subr.mxu0 0.0
        %860 = vmatpush1.msra.mxu0 0.0
        %861 = vmatprep.subr.mxu0 0.0
        %862 = vmatpush1.msra.mxu0 0.0
        %863 = vmatprep.subr.mxu0 0.0
        %864 = vmatpush1.msra.mxu0 0.0
        %865 = vmatprep.subr.mxu0 0.0
        %866 = vmatpush1.msra.mxu0 0.0
        %867 = vmatprep.subr.mxu0 0.0
        %868 = vmatpush1.msra.mxu0 0.0
        %869 = vmatprep.subr.mxu0 0.0
        %870 = vmatpush1.msra.mxu0 0.0
        %871 = vmatprep.subr.mxu0 0.0
        %872 = vmatpush1.msra.mxu0 0.0
        %873 = vmatprep.subr.mxu0 0.0
        %874 = vmatpush1.msra.mxu0 0.0
        %875 = vmatprep.mubr.f32.mxu0 0.0
        %876 = vmatmul.mubr.f32.gmra.mrb[0].mxu0 %v732
        %v877 = vpop.f32.mrb[0].mxu0
        %v878 = vadd.f32 0.0, %v877
        %v879 = vpop.f32.mrb[0].mxu0
        %v880 = vadd.f32 0.0, %v879
        %881 = vdwg.mxu0
        %v882 = vadd.f32 %v736, %v807
        %v883 = vadd.f32 %v737, %v809
        %v884 = vadd.f32 %v738, %v878
        %v885 = vadd.f32 %v739, %v880
        %v886 = vxor.u32 %v882, 2147483648
        %v887 = vmul.f32 %v886, 1.442695
        %v888 = vpow.pop %v887
        %v889 = vadd.f32 %v888, 1.0
        %v890 = vrcp.pop %v889
        %v891 = vmul.f32 1.0, %v890
        %v892 = vxor.u32 %v883, 2147483648
        %v893 = vmul.f32 %v892, 1.442695
        %v894 = vpow.pop %v893
        %v895 = vadd.f32 %v894, 1.0
        %v896 = vrcp.pop %v895
        %v897 = vmul.f32 1.0, %v896
        %v898 = vtanh.pop %v884
        %v899 = vxor.u32 %v885, 2147483648
        %v900 = vmul.f32 %v899, 1.442695
        %v901 = vpow.pop %v900
        %v902 = vadd.f32 %v901, 1.0
        %v903 = vrcp.pop %v902
        %v904 = vmul.f32 1.0, %v903
        %v905 = vmul.f32 %v897, %v730
        %v906 = vmul.f32 %v891, %v898
        %v907 = vadd.f32 %v905, %v906
        %v908 = vtanh.pop %v907
        %v909 = vmul.f32 %v904, %v908
        %s910 = scalar_lea.vmem %s302, 16 [#allocation12]
        %911 = vst [vmem:[%s910] sm:$0xff] %v909
        %s912 = scalar_lea.vmem %s266, 96 [#allocation4]
        %v913 = vld [vmem:[%s912] sm:$0xff]
        %v914 = vld [vmem:[%s912 + $0x8] sm:$0xff]
        %v915 = vld [vmem:[%s912 + $0x10] sm:$0xff]
        %v916 = vld [vmem:[%s912 + $0x18] sm:$0xff]
        %917 = vmatprep.subr.mxu0 %v318
        %918 = vmatpush1.msra.mxu0 %v317
        %919 = vmatprep.subr.mxu0 %v322
        %920 = vmatpush1.msra.mxu0 %v321
        %921 = vmatprep.subr.mxu0 %v326
        %922 = vmatpush1.msra.mxu0 %v325
        %923 = vmatprep.subr.mxu0 %v330
        %924 = vmatpush1.msra.mxu0 %v329
        %925 = vmatprep.subr.mxu0 %v334
        %926 = vmatpush1.msra.mxu0 %v333
        %927 = vmatprep.subr.mxu0 %v338
        %928 = vmatpush1.msra.mxu0 %v337
        %929 = vmatprep.subr.mxu0 %v342
        %930 = vmatpush1.msra.mxu0 %v341
        %931 = vmatprep.subr.mxu0 %v346
        %932 = vmatpush1.msra.mxu0 %v345
        %933 = vmatprep.subr.mxu0 %v350
        %934 = vmatpush1.msra.mxu0 %v349
        %935 = vmatprep.subr.mxu0 %v354
        %936 = vmatpush1.msra.mxu0 %v353
        %937 = vmatprep.subr.mxu0 %v358
        %938 = vmatpush1.msra.mxu0 %v357
        %939 = vmatprep.subr.mxu0 %v362
        %940 = vmatpush1.msra.mxu0 %v361
        %941 = vmatprep.subr.mxu0 %v366
        %942 = vmatpush1.msra.mxu0 %v365
        %943 = vmatprep.subr.mxu0 %v370
        %944 = vmatpush1.msra.mxu0 %v369
        %945 = vmatprep.subr.mxu0 %v374
        %946 = vmatpush1.msra.mxu0 %v373
        %947 = vmatprep.subr.mxu0 %v378
        %948 = vmatpush1.msra.mxu0 %v377
        %949 = vmatprep.subr.mxu0 0.0
        %950 = vmatpush1.msra.mxu0 0.0
        %951 = vmatprep.subr.mxu0 0.0
        %952 = vmatpush1.msra.mxu0 0.0
        %953 = vmatprep.subr.mxu0 0.0
        %954 = vmatpush1.msra.mxu0 0.0
        %955 = vmatprep.subr.mxu0 0.0
        %956 = vmatpush1.msra.mxu0 0.0
        %957 = vmatprep.subr.mxu0 0.0
        %958 = vmatpush1.msra.mxu0 0.0
        %959 = vmatprep.subr.mxu0 0.0
        %960 = vmatpush1.msra.mxu0 0.0
        %961 = vmatprep.subr.mxu0 0.0
        %962 = vmatpush1.msra.mxu0 0.0
        %963 = vmatprep.subr.mxu0 0.0
        %964 = vmatpush1.msra.mxu0 0.0
        %965 = vmatprep.subr.mxu0 0.0
        %966 = vmatpush1.msra.mxu0 0.0
        %967 = vmatprep.subr.mxu0 0.0
        %968 = vmatpush1.msra.mxu0 0.0
        %969 = vmatprep.subr.mxu0 0.0
        %970 = vmatpush1.msra.mxu0 0.0
        %971 = vmatprep.subr.mxu0 0.0
        %972 = vmatpush1.msra.mxu0 0.0
        %973 = vmatprep.subr.mxu0 0.0
        %974 = vmatpush1.msra.mxu0 0.0
        %975 = vmatprep.subr.mxu0 0.0
        %976 = vmatpush1.msra.mxu0 0.0
        %977 = vmatprep.subr.mxu0 0.0
        %978 = vmatpush1.msra.mxu0 0.0
        %979 = vmatprep.subr.mxu0 0.0
        %980 = vmatpush1.msra.mxu0 0.0
        %981 = vmatprep.mubr.f32.mxu0 0.0
        %982 = vmatmul.mubr.f32.gmra.mrb[0].mxu0 %v909
        %v983 = vpop.f32.mrb[0].mxu0
        %v984 = vadd.f32 0.0, %v983
        %v985 = vpop.f32.mrb[0].mxu0
        %v986 = vadd.f32 0.0, %v985
        %987 = vdwg.mxu0
        %988 = vmatprep.subr.mxu0 %v320
        %989 = vmatpush1.msra.mxu0 %v319
        %990 = vmatprep.subr.mxu0 %v324
        %991 = vmatpush1.msra.mxu0 %v323
        %992 = vmatprep.subr.mxu0 %v328
        %993 = vmatpush1.msra.mxu0 %v327
        %994 = vmatprep.subr.mxu0 %v332
        %995 = vmatpush1.msra.mxu0 %v331
        %996 = vmatprep.subr.mxu0 %v336
        %997 = vmatpush1.msra.mxu0 %v335
        %998 = vmatprep.subr.mxu0 %v340
        %999 = vmatpush1.msra.mxu0 %v339
        %1000 = vmatprep.subr.mxu0 %v344
        %1001 = vmatpush1.msra.mxu0 %v343
        %1002 = vmatprep.subr.mxu0 %v348
        %1003 = vmatpush1.msra.mxu0 %v347
        %1004 = vmatprep.subr.mxu0 %v352
        %1005 = vmatpush1.msra.mxu0 %v351
        %1006 = vmatprep.subr.mxu0 %v356
        %1007 = vmatpush1.msra.mxu0 %v355
        %1008 = vmatprep.subr.mxu0 %v360
        %1009 = vmatpush1.msra.mxu0 %v359
        %1010 = vmatprep.subr.mxu0 %v364
        %1011 = vmatpush1.msra.mxu0 %v363
        %1012 = vmatprep.subr.mxu0 %v368
        %1013 = vmatpush1.msra.mxu0 %v367
        %1014 = vmatprep.subr.mxu0 %v372
        %1015 = vmatpush1.msra.mxu0 %v371
        %1016 = vmatprep.subr.mxu0 %v376
        %1017 = vmatpush1.msra.mxu0 %v375
        %1018 = vmatprep.subr.mxu0 %v380
        %1019 = vmatpush1.msra.mxu0 %v379
        %1020 = vmatprep.subr.mxu0 0.0
        %1021 = vmatpush1.msra.mxu0 0.0
        %1022 = vmatprep.subr.mxu0 0.0
        %1023 = vmatpush1.msra.mxu0 0.0
        %1024 = vmatprep.subr.mxu0 0.0
        %1025 = vmatpush1.msra.mxu0 0.0
        %1026 = vmatprep.subr.mxu0 0.0
        %1027 = vmatpush1.msra.mxu0 0.0
        %1028 = vmatprep.subr.mxu0 0.0
        %1029 = vmatpush1.msra.mxu0 0.0
        %1030 = vmatprep.subr.mxu0 0.0
        %1031 = vmatpush1.msra.mxu0 0.0
        %1032 = vmatprep.subr.mxu0 0.0
        %1033 = vmatpush1.msra.mxu0 0.0
        %1034 = vmatprep.subr.mxu0 0.0
        %1035 = vmatpush1.msra.mxu0 0.0
        %1036 = vmatprep.subr.mxu0 0.0
        %1037 = vmatpush1.msra.mxu0 0.0
        %1038 = vmatprep.subr.mxu0 0.0
        %1039 = vmatpush1.msra.mxu0 0.0
        %1040 = vmatprep.subr.mxu0 0.0
        %1041 = vmatpush1.msra.mxu0 0.0
        %1042 = vmatprep.subr.mxu0 0.0
        %1043 = vmatpush1.msra.mxu0 0.0
        %1044 = vmatprep.subr.mxu0 0.0
        %1045 = vmatpush1.msra.mxu0 0.0
        %1046 = vmatprep.subr.mxu0 0.0
        %1047 = vmatpush1.msra.mxu0 0.0
        %1048 = vmatprep.subr.mxu0 0.0
        %1049 = vmatpush1.msra.mxu0 0.0
        %1050 = vmatprep.subr.mxu0 0.0
        %1051 = vmatpush1.msra.mxu0 0.0
        %1052 = vmatprep.mubr.f32.mxu0 0.0
        %1053 = vmatmul.mubr.f32.gmra.mrb[0].mxu0 %v909
        %v1054 = vpop.f32.mrb[0].mxu0
        %v1055 = vadd.f32 0.0, %v1054
        %v1056 = vpop.f32.mrb[0].mxu0
        %v1057 = vadd.f32 0.0, %v1056
        %1058 = vdwg.mxu0
        %v1059 = vadd.f32 %v913, %v984
        %v1060 = vadd.f32 %v914, %v986
        %v1061 = vadd.f32 %v915, %v1055
        %v1062 = vadd.f32 %v916, %v1057
        %v1063 = vxor.u32 %v1059, 2147483648
        %v1064 = vmul.f32 %v1063, 1.442695
        %v1065 = vpow.pop %v1064
        %v1066 = vadd.f32 %v1065, 1.0
        %v1067 = vrcp.pop %v1066
        %v1068 = vmul.f32 1.0, %v1067
        %v1069 = vxor.u32 %v1060, 2147483648
        %v1070 = vmul.f32 %v1069, 1.442695
        %v1071 = vpow.pop %v1070
        %v1072 = vadd.f32 %v1071, 1.0
        %v1073 = vrcp.pop %v1072
        %v1074 = vmul.f32 1.0, %v1073
        %v1075 = vtanh.pop %v1061
        %v1076 = vxor.u32 %v1062, 2147483648
        %v1077 = vmul.f32 %v1076, 1.442695
        %v1078 = vpow.pop %v1077
        %v1079 = vadd.f32 %v1078, 1.0
        %v1080 = vrcp.pop %v1079
        %v1081 = vmul.f32 1.0, %v1080
        %v1082 = vmul.f32 %v1074, %v907
        %v1083 = vmul.f32 %v1068, %v1075
        %v1084 = vadd.f32 %v1082, %v1083
        %v1085 = vtanh.pop %v1084
        %v1086 = vmul.f32 %v1081, %v1085
        %s1087 = scalar_lea.vmem %s302, 24 [#allocation12]
        %1088 = vst [vmem:[%s1087] sm:$0xff] %v1086
        %s1089 = scalar_lea.vmem %s266, 128 [#allocation4]
        %v1090 = vld [vmem:[%s1089] sm:$0xff]
        %v1091 = vld [vmem:[%s1089 + $0x8] sm:$0xff]
        %v1092 = vld [vmem:[%s1089 + $0x10] sm:$0xff]
        %v1093 = vld [vmem:[%s1089 + $0x18] sm:$0xff]
        %1094 = vmatprep.subr.mxu0 %v318
        %1095 = vmatpush1.msra.mxu0 %v317
        %1096 = vmatprep.subr.mxu0 %v322
        %1097 = vmatpush1.msra.mxu0 %v321
        %1098 = vmatprep.subr.mxu0 %v326
        %1099 = vmatpush1.msra.mxu0 %v325
        %1100 = vmatprep.subr.mxu0 %v330
        %1101 = vmatpush1.msra.mxu0 %v329
        %1102 = vmatprep.subr.mxu0 %v334
        %1103 = vmatpush1.msra.mxu0 %v333
        %1104 = vmatprep.subr.mxu0 %v338
        %1105 = vmatpush1.msra.mxu0 %v337
        %1106 = vmatprep.subr.mxu0 %v342
        %1107 = vmatpush1.msra.mxu0 %v341
        %1108 = vmatprep.subr.mxu0 %v346
        %1109 = vmatpush1.msra.mxu0 %v345
        %1110 = vmatprep.subr.mxu0 %v350
        %1111 = vmatpush1.msra.mxu0 %v349
        %1112 = vmatprep.subr.mxu0 %v354
        %1113 = vmatpush1.msra.mxu0 %v353
        %1114 = vmatprep.subr.mxu0 %v358
        %1115 = vmatpush1.msra.mxu0 %v357
        %1116 = vmatprep.subr.mxu0 %v362
        %1117 = vmatpush1.msra.mxu0 %v361
        %1118 = vmatprep.subr.mxu0 %v366
        %1119 = vmatpush1.msra.mxu0 %v365
        %1120 = vmatprep.subr.mxu0 %v370
        %1121 = vmatpush1.msra.mxu0 %v369
        %1122 = vmatprep.subr.mxu0 %v374
        %1123 = vmatpush1.msra.mxu0 %v373
        %1124 = vmatprep.subr.mxu0 %v378
        %1125 = vmatpush1.msra.mxu0 %v377
        %1126 = vmatprep.subr.mxu0 0.0
        %1127 = vmatpush1.msra.mxu0 0.0
        %1128 = vmatprep.subr.mxu0 0.0
        %1129 = vmatpush1.msra.mxu0 0.0
        %1130 = vmatprep.subr.mxu0 0.0
        %1131 = vmatpush1.msra.mxu0 0.0
        %1132 = vmatprep.subr.mxu0 0.0
        %1133 = vmatpush1.msra.mxu0 0.0
        %1134 = vmatprep.subr.mxu0 0.0
        %1135 = vmatpush1.msra.mxu0 0.0
        %1136 = vmatprep.subr.mxu0 0.0
        %1137 = vmatpush1.msra.mxu0 0.0
        %1138 = vmatprep.subr.mxu0 0.0
        %1139 = vmatpush1.msra.mxu0 0.0
        %1140 = vmatprep.subr.mxu0 0.0
        %1141 = vmatpush1.msra.mxu0 0.0
        %1142 = vmatprep.subr.mxu0 0.0
        %1143 = vmatpush1.msra.mxu0 0.0
        %1144 = vmatprep.subr.mxu0 0.0
        %1145 = vmatpush1.msra.mxu0 0.0
        %1146 = vmatprep.subr.mxu0 0.0
        %1147 = vmatpush1.msra.mxu0 0.0
        %1148 = vmatprep.subr.mxu0 0.0
        %1149 = vmatpush1.msra.mxu0 0.0
        %1150 = vmatprep.subr.mxu0 0.0
        %1151 = vmatpush1.msra.mxu0 0.0
        %1152 = vmatprep.subr.mxu0 0.0
        %1153 = vmatpush1.msra.mxu0 0.0
        %1154 = vmatprep.subr.mxu0 0.0
        %1155 = vmatpush1.msra.mxu0 0.0
        %1156 = vmatprep.subr.mxu0 0.0
        %1157 = vmatpush1.msra.mxu0 0.0
        %1158 = vmatprep.mubr.f32.mxu0 0.0
        %1159 = vmatmul.mubr.f32.gmra.mrb[0].mxu0 %v1086
        %v1160 = vpop.f32.mrb[0].mxu0
        %v1161 = vadd.f32 0.0, %v1160
        %v1162 = vpop.f32.mrb[0].mxu0
        %v1163 = vadd.f32 0.0, %v1162
        %1164 = vdwg.mxu0
        %1165 = vmatprep.subr.mxu0 %v320
        %1166 = vmatpush1.msra.mxu0 %v319
        %1167 = vmatprep.subr.mxu0 %v324
        %1168 = vmatpush1.msra.mxu0 %v323
        %1169 = vmatprep.subr.mxu0 %v328
        %1170 = vmatpush1.msra.mxu0 %v327
        %1171 = vmatprep.subr.mxu0 %v332
        %1172 = vmatpush1.msra.mxu0 %v331
        %1173 = vmatprep.subr.mxu0 %v336
        %1174 = vmatpush1.msra.mxu0 %v335
        %1175 = vmatprep.subr.mxu0 %v340
        %1176 = vmatpush1.msra.mxu0 %v339
        %1177 = vmatprep.subr.mxu0 %v344
        %1178 = vmatpush1.msra.mxu0 %v343
        %1179 = vmatprep.subr.mxu0 %v348
        %1180 = vmatpush1.msra.mxu0 %v347
        %1181 = vmatprep.subr.mxu0 %v352
        %1182 = vmatpush1.msra.mxu0 %v351
        %1183 = vmatprep.subr.mxu0 %v356
        %1184 = vmatpush1.msra.mxu0 %v355
        %1185 = vmatprep.subr.mxu0 %v360
        %1186 = vmatpush1.msra.mxu0 %v359
        %1187 = vmatprep.subr.mxu0 %v364
        %1188 = vmatpush1.msra.mxu0 %v363
        %1189 = vmatprep.subr.mxu0 %v368
        %1190 = vmatpush1.msra.mxu0 %v367
        %1191 = vmatprep.subr.mxu0 %v372
        %1192 = vmatpush1.msra.mxu0 %v371
        %1193 = vmatprep.subr.mxu0 %v376
        %1194 = vmatpush1.msra.mxu0 %v375
        %1195 = vmatprep.subr.mxu0 %v380
        %1196 = vmatpush1.msra.mxu0 %v379
        %1197 = vmatprep.subr.mxu0 0.0
        %1198 = vmatpush1.msra.mxu0 0.0
        %1199 = vmatprep.subr.mxu0 0.0
        %1200 = vmatpush1.msra.mxu0 0.0
        %1201 = vmatprep.subr.mxu0 0.0
        %1202 = vmatpush1.msra.mxu0 0.0
        %1203 = vmatprep.subr.mxu0 0.0
        %1204 = vmatpush1.msra.mxu0 0.0
        %1205 = vmatprep.subr.mxu0 0.0
        %1206 = vmatpush1.msra.mxu0 0.0
        %1207 = vmatprep.subr.mxu0 0.0
        %1208 = vmatpush1.msra.mxu0 0.0
        %1209 = vmatprep.subr.mxu0 0.0
        %1210 = vmatpush1.msra.mxu0 0.0
        %1211 = vmatprep.subr.mxu0 0.0
        %1212 = vmatpush1.msra.mxu0 0.0
        %1213 = vmatprep.subr.mxu0 0.0
        %1214 = vmatpush1.msra.mxu0 0.0
        %1215 = vmatprep.subr.mxu0 0.0
        %1216 = vmatpush1.msra.mxu0 0.0
        %1217 = vmatprep.subr.mxu0 0.0
        %1218 = vmatpush1.msra.mxu0 0.0
        %1219 = vmatprep.subr.mxu0 0.0
        %1220 = vmatpush1.msra.mxu0 0.0
        %1221 = vmatprep.subr.mxu0 0.0
        %1222 = vmatpush1.msra.mxu0 0.0
        %1223 = vmatprep.subr.mxu0 0.0
        %1224 = vmatpush1.msra.mxu0 0.0
        %1225 = vmatprep.subr.mxu0 0.0
        %1226 = vmatpush1.msra.mxu0 0.0
        %1227 = vmatprep.subr.mxu0 0.0
        %1228 = vmatpush1.msra.mxu0 0.0
        %1229 = vmatprep.mubr.f32.mxu0 0.0
        %1230 = vmatmul.mubr.f32.gmra.mrb[0].mxu0 %v1086
        %v1231 = vpop.f32.mrb[0].mxu0
        %v1232 = vadd.f32 0.0, %v1231
        %v1233 = vpop.f32.mrb[0].mxu0
        %v1234 = vadd.f32 0.0, %v1233
        %1235 = vdwg.mxu0
        %v1236 = vadd.f32 %v1090, %v1161
        %v1237 = vadd.f32 %v1091, %v1163
        %v1238 = vadd.f32 %v1092, %v1232
        %v1239 = vadd.f32 %v1093, %v1234
        %v1240 = vxor.u32 %v1236, 2147483648
        %v1241 = vmul.f32 %v1240, 1.442695
        %v1242 = vpow.pop %v1241
        %v1243 = vadd.f32 %v1242, 1.0
        %v1244 = vrcp.pop %v1243
        %v1245 = vmul.f32 1.0, %v1244
        %v1246 = vxor.u32 %v1237, 2147483648
        %v1247 = vmul.f32 %v1246, 1.442695
        %v1248 = vpow.pop %v1247
        %v1249 = vadd.f32 %v1248, 1.0
        %v1250 = vrcp.pop %v1249
        %v1251 = vmul.f32 1.0, %v1250
        %v1252 = vtanh.pop %v1238
        %v1253 = vxor.u32 %v1239, 2147483648
        %v1254 = vmul.f32 %v1253, 1.442695
        %v1255 = vpow.pop %v1254
        %v1256 = vadd.f32 %v1255, 1.0
        %v1257 = vrcp.pop %v1256
        %v1258 = vmul.f32 1.0, %v1257
        %v1259 = vmul.f32 %v1251, %v1084
        %v1260 = vmul.f32 %v1245, %v1252
        %v1261 = vadd.f32 %v1259, %v1260
        %v1262 = vtanh.pop %v1261
        %v1263 = vmul.f32 %v1258, %v1262
        %s1264 = scalar_lea.vmem %s302, 32 [#allocation12]
        %1265 = vst [vmem:[%s1264] sm:$0xff] %v1263
        %s1266 = scalar_lea.vmem %s266, 160 [#allocation4]
        %v1267 = vld [vmem:[%s1266] sm:$0xff]
        %v1268 = vld [vmem:[%s1266 + $0x8] sm:$0xff]
        %v1269 = vld [vmem:[%s1266 + $0x10] sm:$0xff]
        %v1270 = vld [vmem:[%s1266 + $0x18] sm:$0xff]
        %1271 = vmatprep.subr.mxu0 %v318
        %1272 = vmatpush1.msra.mxu0 %v317
        %1273 = vmatprep.subr.mxu0 %v322
        %1274 = vmatpush1.msra.mxu0 %v321
        %1275 = vmatprep.subr.mxu0 %v326
        %1276 = vmatpush1.msra.mxu0 %v325
        %1277 = vmatprep.subr.mxu0 %v330
        %1278 = vmatpush1.msra.mxu0 %v329
        %1279 = vmatprep.subr.mxu0 %v334
        %1280 = vmatpush1.msra.mxu0 %v333
        %1281 = vmatprep.subr.mxu0 %v338
        %1282 = vmatpush1.msra.mxu0 %v337
        %1283 = vmatprep.subr.mxu0 %v342
        %1284 = vmatpush1.msra.mxu0 %v341
        %1285 = vmatprep.subr.mxu0 %v346
        %1286 = vmatpush1.msra.mxu0 %v345
        %1287 = vmatprep.subr.mxu0 %v350
        %1288 = vmatpush1.msra.mxu0 %v349
        %1289 = vmatprep.subr.mxu0 %v354
        %1290 = vmatpush1.msra.mxu0 %v353
        %1291 = vmatprep.subr.mxu0 %v358
        %1292 = vmatpush1.msra.mxu0 %v357
        %1293 = vmatprep.subr.mxu0 %v362
        %1294 = vmatpush1.msra.mxu0 %v361
        %1295 = vmatprep.subr.mxu0 %v366
        %1296 = vmatpush1.msra.mxu0 %v365
        %1297 = vmatprep.subr.mxu0 %v370
        %1298 = vmatpush1.msra.mxu0 %v369
        %1299 = vmatprep.subr.mxu0 %v374
        %1300 = vmatpush1.msra.mxu0 %v373
        %1301 = vmatprep.subr.mxu0 %v378
        %1302 = vmatpush1.msra.mxu0 %v377
        %1303 = vmatprep.subr.mxu0 0.0
        %1304 = vmatpush1.msra.mxu0 0.0
        %1305 = vmatprep.subr.mxu0 0.0
        %1306 = vmatpush1.msra.mxu0 0.0
        %1307 = vmatprep.subr.mxu0 0.0
        %1308 = vmatpush1.msra.mxu0 0.0
        %1309 = vmatprep.subr.mxu0 0.0
        %1310 = vmatpush1.msra.mxu0 0.0
        %1311 = vmatprep.subr.mxu0 0.0
        %1312 = vmatpush1.msra.mxu0 0.0
        %1313 = vmatprep.subr.mxu0 0.0
        %1314 = vmatpush1.msra.mxu0 0.0
        %1315 = vmatprep.subr.mxu0 0.0
        %1316 = vmatpush1.msra.mxu0 0.0
        %1317 = vmatprep.subr.mxu0 0.0
        %1318 = vmatpush1.msra.mxu0 0.0
        %1319 = vmatprep.subr.mxu0 0.0
        %1320 = vmatpush1.msra.mxu0 0.0
        %1321 = vmatprep.subr.mxu0 0.0
        %1322 = vmatpush1.msra.mxu0 0.0
        %1323 = vmatprep.subr.mxu0 0.0
        %1324 = vmatpush1.msra.mxu0 0.0
        %1325 = vmatprep.subr.mxu0 0.0
        %1326 = vmatpush1.msra.mxu0 0.0
        %1327 = vmatprep.subr.mxu0 0.0
        %1328 = vmatpush1.msra.mxu0 0.0
        %1329 = vmatprep.subr.mxu0 0.0
        %1330 = vmatpush1.msra.mxu0 0.0
        %1331 = vmatprep.subr.mxu0 0.0
        %1332 = vmatpush1.msra.mxu0 0.0
        %1333 = vmatprep.subr.mxu0 0.0
        %1334 = vmatpush1.msra.mxu0 0.0
        %1335 = vmatprep.mubr.f32.mxu0 0.0
        %1336 = vmatmul.mubr.f32.gmra.mrb[0].mxu0 %v1263
        %v1337 = vpop.f32.mrb[0].mxu0
        %v1338 = vadd.f32 0.0, %v1337
        %v1339 = vpop.f32.mrb[0].mxu0
        %v1340 = vadd.f32 0.0, %v1339
        %1341 = vdwg.mxu0
        %1342 = vmatprep.subr.mxu0 %v320
        %1343 = vmatpush1.msra.mxu0 %v319
        %1344 = vmatprep.subr.mxu0 %v324
        %1345 = vmatpush1.msra.mxu0 %v323
        %1346 = vmatprep.subr.mxu0 %v328
        %1347 = vmatpush1.msra.mxu0 %v327
        %1348 = vmatprep.subr.mxu0 %v332
        %1349 = vmatpush1.msra.mxu0 %v331
        %1350 = vmatprep.subr.mxu0 %v336
        %1351 = vmatpush1.msra.mxu0 %v335
        %1352 = vmatprep.subr.mxu0 %v340
        %1353 = vmatpush1.msra.mxu0 %v339
        %1354 = vmatprep.subr.mxu0 %v344
        %1355 = vmatpush1.msra.mxu0 %v343
        %1356 = vmatprep.subr.mxu0 %v348
        %1357 = vmatpush1.msra.mxu0 %v347
        %1358 = vmatprep.subr.mxu0 %v352
        %1359 = vmatpush1.msra.mxu0 %v351
        %1360 = vmatprep.subr.mxu0 %v356
        %1361 = vmatpush1.msra.mxu0 %v355
        %1362 = vmatprep.subr.mxu0 %v360
        %1363 = vmatpush1.msra.mxu0 %v359
        %1364 = vmatprep.subr.mxu0 %v364
        %1365 = vmatpush1.msra.mxu0 %v363
        %1366 = vmatprep.subr.mxu0 %v368
        %1367 = vmatpush1.msra.mxu0 %v367
        %1368 = vmatprep.subr.mxu0 %v372
        %1369 = vmatpush1.msra.mxu0 %v371
        %1370 = vmatprep.subr.mxu0 %v376
        %1371 = vmatpush1.msra.mxu0 %v375
        %1372 = vmatprep.subr.mxu0 %v380
        %1373 = vmatpush1.msra.mxu0 %v379
        %1374 = vmatprep.subr.mxu0 0.0
        %1375 = vmatpush1.msra.mxu0 0.0
        %1376 = vmatprep.subr.mxu0 0.0
        %1377 = vmatpush1.msra.mxu0 0.0
        %1378 = vmatprep.subr.mxu0 0.0
        %1379 = vmatpush1.msra.mxu0 0.0
        %1380 = vmatprep.subr.mxu0 0.0
        %1381 = vmatpush1.msra.mxu0 0.0
        %1382 = vmatprep.subr.mxu0 0.0
        %1383 = vmatpush1.msra.mxu0 0.0
        %1384 = vmatprep.subr.mxu0 0.0
        %1385 = vmatpush1.msra.mxu0 0.0
        %1386 = vmatprep.subr.mxu0 0.0
        %1387 = vmatpush1.msra.mxu0 0.0
        %1388 = vmatprep.subr.mxu0 0.0
        %1389 = vmatpush1.msra.mxu0 0.0
        %1390 = vmatprep.subr.mxu0 0.0
        %1391 = vmatpush1.msra.mxu0 0.0
        %1392 = vmatprep.subr.mxu0 0.0
        %1393 = vmatpush1.msra.mxu0 0.0
        %1394 = vmatprep.subr.mxu0 0.0
        %1395 = vmatpush1.msra.mxu0 0.0
        %1396 = vmatprep.subr.mxu0 0.0
        %1397 = vmatpush1.msra.mxu0 0.0
        %1398 = vmatprep.subr.mxu0 0.0
        %1399 = vmatpush1.msra.mxu0 0.0
        %1400 = vmatprep.subr.mxu0 0.0
        %1401 = vmatpush1.msra.mxu0 0.0
        %1402 = vmatprep.subr.mxu0 0.0
        %1403 = vmatpush1.msra.mxu0 0.0
        %1404 = vmatprep.subr.mxu0 0.0
        %1405 = vmatpush1.msra.mxu0 0.0
        %1406 = vmatprep.mubr.f32.mxu0 0.0
        %1407 = vmatmul.mubr.f32.gmra.mrb[0].mxu0 %v1263
        %v1408 = vpop.f32.mrb[0].mxu0
        %v1409 = vadd.f32 0.0, %v1408
        %v1410 = vpop.f32.mrb[0].mxu0
        %v1411 = vadd.f32 0.0, %v1410
        %1412 = vdwg.mxu0
        %v1413 = vadd.f32 %v1267, %v1338
        %v1414 = vadd.f32 %v1268, %v1340
        %v1415 = vadd.f32 %v1269, %v1409
        %v1416 = vadd.f32 %v1270, %v1411
        %v1417 = vxor.u32 %v1413, 2147483648
        %v1418 = vmul.f32 %v1417, 1.442695
        %v1419 = vpow.pop %v1418
        %v1420 = vadd.f32 %v1419, 1.0
        %v1421 = vrcp.pop %v1420
        %v1422 = vmul.f32 1.0, %v1421
        %v1423 = vxor.u32 %v1414, 2147483648
        %v1424 = vmul.f32 %v1423, 1.442695
        %v1425 = vpow.pop %v1424
        %v1426 = vadd.f32 %v1425, 1.0
        %v1427 = vrcp.pop %v1426
        %v1428 = vmul.f32 1.0, %v1427
        %v1429 = vtanh.pop %v1415
        %v1430 = vxor.u32 %v1416, 2147483648
        %v1431 = vmul.f32 %v1430, 1.442695
        %v1432 = vpow.pop %v1431
        %v1433 = vadd.f32 %v1432, 1.0
        %v1434 = vrcp.pop %v1433
        %v1435 = vmul.f32 1.0, %v1434
        %v1436 = vmul.f32 %v1428, %v1261
        %v1437 = vmul.f32 %v1422, %v1429
        %v1438 = vadd.f32 %v1436, %v1437
        %v1439 = vtanh.pop %v1438
        %v1440 = vmul.f32 %v1435, %v1439
        %s1441 = scalar_lea.vmem %s302, 40 [#allocation12]
        %1442 = vst [vmem:[%s1441] sm:$0xff] %v1440
        %s1443 = scalar_lea.vmem %s266, 192 [#allocation4]
        %v1444 = vld [vmem:[%s1443] sm:$0xff]
        %v1445 = vld [vmem:[%s1443 + $0x8] sm:$0xff]
        %v1446 = vld [vmem:[%s1443 + $0x10] sm:$0xff]
        %v1447 = vld [vmem:[%s1443 + $0x18] sm:$0xff]
        %1448 = vmatprep.subr.mxu0 %v318
        %1449 = vmatpush1.msra.mxu0 %v317
        %1450 = vmatprep.subr.mxu0 %v322
        %1451 = vmatpush1.msra.mxu0 %v321
        %1452 = vmatprep.subr.mxu0 %v326
        %1453 = vmatpush1.msra.mxu0 %v325
        %1454 = vmatprep.subr.mxu0 %v330
        %1455 = vmatpush1.msra.mxu0 %v329
        %1456 = vmatprep.subr.mxu0 %v334
        %1457 = vmatpush1.msra.mxu0 %v333
        %1458 = vmatprep.subr.mxu0 %v338
        %1459 = vmatpush1.msra.mxu0 %v337
        %1460 = vmatprep.subr.mxu0 %v342
        %1461 = vmatpush1.msra.mxu0 %v341
        %1462 = vmatprep.subr.mxu0 %v346
        %1463 = vmatpush1.msra.mxu0 %v345
        %1464 = vmatprep.subr.mxu0 %v350
        %1465 = vmatpush1.msra.mxu0 %v349
        %1466 = vmatprep.subr.mxu0 %v354
        %1467 = vmatpush1.msra.mxu0 %v353
        %1468 = vmatprep.subr.mxu0 %v358
        %1469 = vmatpush1.msra.mxu0 %v357
        %1470 = vmatprep.subr.mxu0 %v362
        %1471 = vmatpush1.msra.mxu0 %v361
        %1472 = vmatprep.subr.mxu0 %v366
        %1473 = vmatpush1.msra.mxu0 %v365
        %1474 = vmatprep.subr.mxu0 %v370
        %1475 = vmatpush1.msra.mxu0 %v369
        %1476 = vmatprep.subr.mxu0 %v374
        %1477 = vmatpush1.msra.mxu0 %v373
        %1478 = vmatprep.subr.mxu0 %v378
        %1479 = vmatpush1.msra.mxu0 %v377
        %1480 = vmatprep.subr.mxu0 0.0
        %1481 = vmatpush1.msra.mxu0 0.0
        %1482 = vmatprep.subr.mxu0 0.0
        %1483 = vmatpush1.msra.mxu0 0.0
        %1484 = vmatprep.subr.mxu0 0.0
        %1485 = vmatpush1.msra.mxu0 0.0
        %1486 = vmatprep.subr.mxu0 0.0
        %1487 = vmatpush1.msra.mxu0 0.0
        %1488 = vmatprep.subr.mxu0 0.0
        %1489 = vmatpush1.msra.mxu0 0.0
        %1490 = vmatprep.subr.mxu0 0.0
        %1491 = vmatpush1.msra.mxu0 0.0
        %1492 = vmatprep.subr.mxu0 0.0
        %1493 = vmatpush1.msra.mxu0 0.0
        %1494 = vmatprep.subr.mxu0 0.0
        %1495 = vmatpush1.msra.mxu0 0.0
        %1496 = vmatprep.subr.mxu0 0.0
        %1497 = vmatpush1.msra.mxu0 0.0
        %1498 = vmatprep.subr.mxu0 0.0
        %1499 = vmatpush1.msra.mxu0 0.0
        %1500 = vmatprep.subr.mxu0 0.0
        %1501 = vmatpush1.msra.mxu0 0.0
        %1502 = vmatprep.subr.mxu0 0.0
        %1503 = vmatpush1.msra.mxu0 0.0
        %1504 = vmatprep.subr.mxu0 0.0
        %1505 = vmatpush1.msra.mxu0 0.0
        %1506 = vmatprep.subr.mxu0 0.0
        %1507 = vmatpush1.msra.mxu0 0.0
        %1508 = vmatprep.subr.mxu0 0.0
        %1509 = vmatpush1.msra.mxu0 0.0
        %1510 = vmatprep.subr.mxu0 0.0
        %1511 = vmatpush1.msra.mxu0 0.0
        %1512 = vmatprep.mubr.f32.mxu0 0.0
        %1513 = vmatmul.mubr.f32.gmra.mrb[0].mxu0 %v1440
        %v1514 = vpop.f32.mrb[0].mxu0
        %v1515 = vadd.f32 0.0, %v1514
        %v1516 = vpop.f32.mrb[0].mxu0
        %v1517 = vadd.f32 0.0, %v1516
        %1518 = vdwg.mxu0
        %1519 = vmatprep.subr.mxu0 %v320
        %1520 = vmatpush1.msra.mxu0 %v319
        %1521 = vmatprep.subr.mxu0 %v324
        %1522 = vmatpush1.msra.mxu0 %v323
        %1523 = vmatprep.subr.mxu0 %v328
        %1524 = vmatpush1.msra.mxu0 %v327
        %1525 = vmatprep.subr.mxu0 %v332
        %1526 = vmatpush1.msra.mxu0 %v331
        %1527 = vmatprep.subr.mxu0 %v336
        %1528 = vmatpush1.msra.mxu0 %v335
        %1529 = vmatprep.subr.mxu0 %v340
        %1530 = vmatpush1.msra.mxu0 %v339
        %1531 = vmatprep.subr.mxu0 %v344
        %1532 = vmatpush1.msra.mxu0 %v343
        %1533 = vmatprep.subr.mxu0 %v348
        %1534 = vmatpush1.msra.mxu0 %v347
        %1535 = vmatprep.subr.mxu0 %v352
        %1536 = vmatpush1.msra.mxu0 %v351
        %1537 = vmatprep.subr.mxu0 %v356
        %1538 = vmatpush1.msra.mxu0 %v355
        %1539 = vmatprep.subr.mxu0 %v360
        %1540 = vmatpush1.msra.mxu0 %v359
        %1541 = vmatprep.subr.mxu0 %v364
        %1542 = vmatpush1.msra.mxu0 %v363
        %1543 = vmatprep.subr.mxu0 %v368
        %1544 = vmatpush1.msra.mxu0 %v367
        %1545 = vmatprep.subr.mxu0 %v372
        %1546 = vmatpush1.msra.mxu0 %v371
        %1547 = vmatprep.subr.mxu0 %v376
        %1548 = vmatpush1.msra.mxu0 %v375
        %1549 = vmatprep.subr.mxu0 %v380
        %1550 = vmatpush1.msra.mxu0 %v379
        %1551 = vmatprep.subr.mxu0 0.0
        %1552 = vmatpush1.msra.mxu0 0.0
        %1553 = vmatprep.subr.mxu0 0.0
        %1554 = vmatpush1.msra.mxu0 0.0
        %1555 = vmatprep.subr.mxu0 0.0
        %1556 = vmatpush1.msra.mxu0 0.0
        %1557 = vmatprep.subr.mxu0 0.0
        %1558 = vmatpush1.msra.mxu0 0.0
        %1559 = vmatprep.subr.mxu0 0.0
        %1560 = vmatpush1.msra.mxu0 0.0
        %1561 = vmatprep.subr.mxu0 0.0
        %1562 = vmatpush1.msra.mxu0 0.0
        %1563 = vmatprep.subr.mxu0 0.0
        %1564 = vmatpush1.msra.mxu0 0.0
        %1565 = vmatprep.subr.mxu0 0.0
        %1566 = vmatpush1.msra.mxu0 0.0
        %1567 = vmatprep.subr.mxu0 0.0
        %1568 = vmatpush1.msra.mxu0 0.0
        %1569 = vmatprep.subr.mxu0 0.0
        %1570 = vmatpush1.msra.mxu0 0.0
        %1571 = vmatprep.subr.mxu0 0.0
        %1572 = vmatpush1.msra.mxu0 0.0
        %1573 = vmatprep.subr.mxu0 0.0
        %1574 = vmatpush1.msra.mxu0 0.0
        %1575 = vmatprep.subr.mxu0 0.0
        %1576 = vmatpush1.msra.mxu0 0.0
        %1577 = vmatprep.subr.mxu0 0.0
        %1578 = vmatpush1.msra.mxu0 0.0
        %1579 = vmatprep.subr.mxu0 0.0
        %1580 = vmatpush1.msra.mxu0 0.0
        %1581 = vmatprep.subr.mxu0 0.0
        %1582 = vmatpush1.msra.mxu0 0.0
        %1583 = vmatprep.mubr.f32.mxu0 0.0
        %1584 = vmatmul.mubr.f32.gmra.mrb[0].mxu0 %v1440
        %v1585 = vpop.f32.mrb[0].mxu0
        %v1586 = vadd.f32 0.0, %v1585
        %v1587 = vpop.f32.mrb[0].mxu0
        %v1588 = vadd.f32 0.0, %v1587
        %1589 = vdwg.mxu0
        %v1590 = vadd.f32 %v1444, %v1515
        %v1591 = vadd.f32 %v1445, %v1517
        %v1592 = vadd.f32 %v1446, %v1586
        %v1593 = vadd.f32 %v1447, %v1588
        %v1594 = vxor.u32 %v1590, 2147483648
        %v1595 = vmul.f32 %v1594, 1.442695
        %v1596 = vpow.pop %v1595
        %v1597 = vadd.f32 %v1596, 1.0
        %v1598 = vrcp.pop %v1597
        %v1599 = vmul.f32 1.0, %v1598
        %v1600 = vxor.u32 %v1591, 2147483648
        %v1601 = vmul.f32 %v1600, 1.442695
        %v1602 = vpow.pop %v1601
        %v1603 = vadd.f32 %v1602, 1.0
        %v1604 = vrcp.pop %v1603
        %v1605 = vmul.f32 1.0, %v1604
        %v1606 = vtanh.pop %v1592
        %v1607 = vxor.u32 %v1593, 2147483648
        %v1608 = vmul.f32 %v1607, 1.442695
        %v1609 = vpow.pop %v1608
        %v1610 = vadd.f32 %v1609, 1.0
        %v1611 = vrcp.pop %v1610
        %v1612 = vmul.f32 1.0, %v1611
        %v1613 = vmul.f32 %v1605, %v1438
        %v1614 = vmul.f32 %v1599, %v1606
        %v1615 = vadd.f32 %v1613, %v1614
        %v1616 = vtanh.pop %v1615
        %v1617 = vmul.f32 %v1612, %v1616
        %s1618 = scalar_lea.vmem %s302, 48 [#allocation12]
        %1619 = vst [vmem:[%s1618] sm:$0xff] %v1617
        %s1620 = scalar_lea.vmem %s266, 224 [#allocation4]
        %v1621 = vld [vmem:[%s1620] sm:$0xff]
        %v1622 = vld [vmem:[%s1620 + $0x8] sm:$0xff]
        %v1623 = vld [vmem:[%s1620 + $0x10] sm:$0xff]
        %v1624 = vld [vmem:[%s1620 + $0x18] sm:$0xff]
        %1625 = vmatprep.subr.mxu0 %v318
        %1626 = vmatpush1.msra.mxu0 %v317
        %1627 = vmatprep.subr.mxu0 %v322
        %1628 = vmatpush1.msra.mxu0 %v321
        %1629 = vmatprep.subr.mxu0 %v326
        %1630 = vmatpush1.msra.mxu0 %v325
        %1631 = vmatprep.subr.mxu0 %v330
        %1632 = vmatpush1.msra.mxu0 %v329
        %1633 = vmatprep.subr.mxu0 %v334
        %1634 = vmatpush1.msra.mxu0 %v333
        %1635 = vmatprep.subr.mxu0 %v338
        %1636 = vmatpush1.msra.mxu0 %v337
        %1637 = vmatprep.subr.mxu0 %v342
        %1638 = vmatpush1.msra.mxu0 %v341
        %1639 = vmatprep.subr.mxu0 %v346
        %1640 = vmatpush1.msra.mxu0 %v345
        %1641 = vmatprep.subr.mxu0 %v350
        %1642 = vmatpush1.msra.mxu0 %v349
        %1643 = vmatprep.subr.mxu0 %v354
        %1644 = vmatpush1.msra.mxu0 %v353
        %1645 = vmatprep.subr.mxu0 %v358
        %1646 = vmatpush1.msra.mxu0 %v357
        %1647 = vmatprep.subr.mxu0 %v362
        %1648 = vmatpush1.msra.mxu0 %v361
        %1649 = vmatprep.subr.mxu0 %v366
        %1650 = vmatpush1.msra.mxu0 %v365
        %1651 = vmatprep.subr.mxu0 %v370
        %1652 = vmatpush1.msra.mxu0 %v369
        %1653 = vmatprep.subr.mxu0 %v374
        %1654 = vmatpush1.msra.mxu0 %v373
        %1655 = vmatprep.subr.mxu0 %v378
        %1656 = vmatpush1.msra.mxu0 %v377
        %1657 = vmatprep.subr.mxu0 0.0
        %1658 = vmatpush1.msra.mxu0 0.0
        %1659 = vmatprep.subr.mxu0 0.0
        %1660 = vmatpush1.msra.mxu0 0.0
        %1661 = vmatprep.subr.mxu0 0.0
        %1662 = vmatpush1.msra.mxu0 0.0
        %1663 = vmatprep.subr.mxu0 0.0
        %1664 = vmatpush1.msra.mxu0 0.0
        %1665 = vmatprep.subr.mxu0 0.0
        %1666 = vmatpush1.msra.mxu0 0.0
        %1667 = vmatprep.subr.mxu0 0.0
        %1668 = vmatpush1.msra.mxu0 0.0
        %1669 = vmatprep.subr.mxu0 0.0
        %1670 = vmatpush1.msra.mxu0 0.0
        %1671 = vmatprep.subr.mxu0 0.0
        %1672 = vmatpush1.msra.mxu0 0.0
        %1673 = vmatprep.subr.mxu0 0.0
        %1674 = vmatpush1.msra.mxu0 0.0
        %1675 = vmatprep.subr.mxu0 0.0
        %1676 = vmatpush1.msra.mxu0 0.0
        %1677 = vmatprep.subr.mxu0 0.0
        %1678 = vmatpush1.msra.mxu0 0.0
        %1679 = vmatprep.subr.mxu0 0.0
        %1680 = vmatpush1.msra.mxu0 0.0
        %1681 = vmatprep.subr.mxu0 0.0
        %1682 = vmatpush1.msra.mxu0 0.0
        %1683 = vmatprep.subr.mxu0 0.0
        %1684 = vmatpush1.msra.mxu0 0.0
        %1685 = vmatprep.subr.mxu0 0.0
        %1686 = vmatpush1.msra.mxu0 0.0
        %1687 = vmatprep.subr.mxu0 0.0
        %1688 = vmatpush1.msra.mxu0 0.0
        %1689 = vmatprep.mubr.f32.mxu0 0.0
        %1690 = vmatmul.mubr.f32.gmra.mrb[0].mxu0 %v1617
        %v1691 = vpop.f32.mrb[0].mxu0
        %v1692 = vadd.f32 0.0, %v1691
        %v1693 = vpop.f32.mrb[0].mxu0
        %v1694 = vadd.f32 0.0, %v1693
        %1695 = vdwg.mxu0
        %1696 = vmatprep.subr.mxu0 %v320
        %1697 = vmatpush1.msra.mxu0 %v319
        %1698 = vmatprep.subr.mxu0 %v324
        %1699 = vmatpush1.msra.mxu0 %v323
        %1700 = vmatprep.subr.mxu0 %v328
        %1701 = vmatpush1.msra.mxu0 %v327
        %1702 = vmatprep.subr.mxu0 %v332
        %1703 = vmatpush1.msra.mxu0 %v331
        %1704 = vmatprep.subr.mxu0 %v336
        %1705 = vmatpush1.msra.mxu0 %v335
        %1706 = vmatprep.subr.mxu0 %v340
        %1707 = vmatpush1.msra.mxu0 %v339
        %1708 = vmatprep.subr.mxu0 %v344
        %1709 = vmatpush1.msra.mxu0 %v343
        %1710 = vmatprep.subr.mxu0 %v348
        %1711 = vmatpush1.msra.mxu0 %v347
        %1712 = vmatprep.subr.mxu0 %v352
        %1713 = vmatpush1.msra.mxu0 %v351
        %1714 = vmatprep.subr.mxu0 %v356
        %1715 = vmatpush1.msra.mxu0 %v355
        %1716 = vmatprep.subr.mxu0 %v360
        %1717 = vmatpush1.msra.mxu0 %v359
        %1718 = vmatprep.subr.mxu0 %v364
        %1719 = vmatpush1.msra.mxu0 %v363
        %1720 = vmatprep.subr.mxu0 %v368
        %1721 = vmatpush1.msra.mxu0 %v367
        %1722 = vmatprep.subr.mxu0 %v372
        %1723 = vmatpush1.msra.mxu0 %v371
        %1724 = vmatprep.subr.mxu0 %v376
        %1725 = vmatpush1.msra.mxu0 %v375
        %1726 = vmatprep.subr.mxu0 %v380
        %1727 = vmatpush1.msra.mxu0 %v379
        %1728 = vmatprep.subr.mxu0 0.0
        %1729 = vmatpush1.msra.mxu0 0.0
        %1730 = vmatprep.subr.mxu0 0.0
        %1731 = vmatpush1.msra.mxu0 0.0
        %1732 = vmatprep.subr.mxu0 0.0
        %1733 = vmatpush1.msra.mxu0 0.0
        %1734 = vmatprep.subr.mxu0 0.0
        %1735 = vmatpush1.msra.mxu0 0.0
        %1736 = vmatprep.subr.mxu0 0.0
        %1737 = vmatpush1.msra.mxu0 0.0
        %1738 = vmatprep.subr.mxu0 0.0
        %1739 = vmatpush1.msra.mxu0 0.0
        %1740 = vmatprep.subr.mxu0 0.0
        %1741 = vmatpush1.msra.mxu0 0.0
        %1742 = vmatprep.subr.mxu0 0.0
        %1743 = vmatpush1.msra.mxu0 0.0
        %1744 = vmatprep.subr.mxu0 0.0
        %1745 = vmatpush1.msra.mxu0 0.0
        %1746 = vmatprep.subr.mxu0 0.0
        %1747 = vmatpush1.msra.mxu0 0.0
        %1748 = vmatprep.subr.mxu0 0.0
        %1749 = vmatpush1.msra.mxu0 0.0
        %1750 = vmatprep.subr.mxu0 0.0
        %1751 = vmatpush1.msra.mxu0 0.0
        %1752 = vmatprep.subr.mxu0 0.0
        %1753 = vmatpush1.msra.mxu0 0.0
        %1754 = vmatprep.subr.mxu0 0.0
        %1755 = vmatpush1.msra.mxu0 0.0
        %1756 = vmatprep.subr.mxu0 0.0
        %1757 = vmatpush1.msra.mxu0 0.0
        %1758 = vmatprep.subr.mxu0 0.0
        %1759 = vmatpush1.msra.mxu0 0.0
        %1760 = vmatprep.mubr.f32.mxu0 0.0
        %1761 = vmatmul.mubr.f32.gmra.mrb[0].mxu0 %v1617
        %v1762 = vpop.f32.mrb[0].mxu0
        %v1763 = vadd.f32 0.0, %v1762
        %v1764 = vpop.f32.mrb[0].mxu0
        %v1765 = vadd.f32 0.0, %v1764
        %1766 = vdwg.mxu0
        %v1767 = vadd.f32 %v1621, %v1692
        %v1768 = vadd.f32 %v1622, %v1694
        %v1769 = vadd.f32 %v1623, %v1763
        %v1770 = vadd.f32 %v1624, %v1765
        %v1771 = vxor.u32 %v1767, 2147483648
        %v1772 = vmul.f32 %v1771, 1.442695
        %v1773 = vpow.pop %v1772
        %v1774 = vadd.f32 %v1773, 1.0
        %v1775 = vrcp.pop %v1774
        %v1776 = vmul.f32 1.0, %v1775
        %v1777 = vxor.u32 %v1768, 2147483648
        %v1778 = vmul.f32 %v1777, 1.442695
        %v1779 = vpow.pop %v1778
        %v1780 = vadd.f32 %v1779, 1.0
        %v1781 = vrcp.pop %v1780
        %v1782 = vmul.f32 1.0, %v1781
        %v1783 = vtanh.pop %v1769
        %v1784 = vxor.u32 %v1770, 2147483648
        %v1785 = vmul.f32 %v1784, 1.442695
        %v1786 = vpow.pop %v1785
        %v1787 = vadd.f32 %v1786, 1.0
        %v1788 = vrcp.pop %v1787
        %v1789 = vmul.f32 1.0, %v1788
        %v1790 = vmul.f32 %v1782, %v1615
        %v1791 = vmul.f32 %v1776, %v1783
        %v1792 = vadd.f32 %v1790, %v1791
        %v1793 = vtanh.pop %v1792
        %v1794 = vmul.f32 %v1789, %v1793
        %s1795 = scalar_lea.vmem %s302, 56 [#allocation12]
        %1796 = vst [vmem:[%s1795] sm:$0xff] %v1794
        %1797 = vst [vmem:[#allocation2] sm:$0xff] %v1794
        %1798 = vst [vmem:[#allocation3] sm:$0xff] %v1792
        %p1799 = scmp.eq.s32.totalorder %s27, 1
        // Predicated region
        $region57: #{tpu_custom_call.1} parent=35 // pred_check
          %p1800 = pneg %p1799
        $region58: #{tpu_custom_call.1} parent=35 // pred_check_branch
          %1802 = sbr.rel (%p1800) target = $region60
        $region59: #{tpu_custom_call.1} parent=35 // pred_region
          %1803 = vst [vmem:[#allocation13] sm:$0xff] %v1794
          %1804 = vst [vmem:[#allocation15] sm:$0xff] %v1792
        $region60: #{tpu_custom_call.1} parent=35 // pred_fallthru
          _
        %s1805 = sand.u32 %s124, 1
        %s1806 = scalar_lea.sflag [#allocation6], %s1805
        %s1807 = sand.u32 %s124, 1
        %s1808 = smul.addr %s1807, 64
        %s1809 = scalar_lea.vmem [#allocation12], %s1808
        // Predicated region
        $region61: #{tpu_custom_call.1} parent=35 // pred_check
          %p1810 = pneg %p134
        $region62: #{tpu_custom_call.1} parent=35 // pred_check_branch
          %1812 = sbr.rel (%p1810) target = $region64
        $region63: #{tpu_custom_call.1} parent=35 // pred_region
          %s1813 = smul.u32 8, %s27
          %s1815 = ssub.s32 1024, 1024
          %1816 = vsyncadd %s1806, %s1815
          %s1817 = smul.addr %s1813, 128
          %s1818 = scalar_lea.hbm %s4, %s1817
          %s1819 = sshll.u32 %s1809, 4
          %s1820 = int_to_ptr.vmem [resolvable:$true] %s1819
          %1825 = dma.vmem_to_hbm [thread:$0]  %s1820, 1024, %s1818, %s1806, 128, 128, 8
        $region64: #{tpu_custom_call.1} parent=35 // pred_fallthru
          _
        // Predicated region
        $region65: #{tpu_custom_call.1} parent=35 // pred_check
          %p1826 = pneg %p155
        $region66: #{tpu_custom_call.1} parent=35 // pred_check_branch
          %1828 = sbr.rel (%p1826) target = $region68
        $region67: #{tpu_custom_call.1} parent=35 // pred_region
          %s1830 = ssub.s32 128, 128
          %1831 = vsyncadd [#allocation14], %s1830
          %s1833 = sshll.u32 [#allocation13], 4
          %s1834 = int_to_ptr.vmem [resolvable:$true] %s1833
          %1836 = dma.vmem_to_hbm [thread:$0]  %s1834, 128, %s5, [#allocation14]
        $region68: #{tpu_custom_call.1} parent=35 // pred_fallthru
          _
        // Predicated region
        $region69: #{tpu_custom_call.1} parent=35 // pred_check
          %p1837 = pneg %p176
        $region70: #{tpu_custom_call.1} parent=35 // pred_check_branch
          %1839 = sbr.rel (%p1837) target = $region72
        $region71: #{tpu_custom_call.1} parent=35 // pred_region
          %s1841 = ssub.s32 128, 128
          %1842 = vsyncadd [#allocation14], %s1841
          %s1844 = sshll.u32 [#allocation15], 4
          %s1845 = int_to_ptr.vmem [resolvable:$true] %s1844
          %1847 = dma.vmem_to_hbm [thread:$0]  %s1845, 128, %s6, [#allocation14]
        $region72: #{tpu_custom_call.1} parent=35 // pred_fallthru
          _
        // Predicated region
        $region73: #{tpu_custom_call.1} parent=35 // pred_check
          %p1848 = pneg %p155
        $region74: #{tpu_custom_call.1} parent=35 // pred_check_branch
          %1850 = sbr.rel (%p1848) target = $region76
        $region75: #{tpu_custom_call.1} parent=35 // pred_region
          %1851 = dma.done [#allocation14], 128
        $region76: #{tpu_custom_call.1} parent=35 // pred_fallthru
          _
        // Predicated region
        $region77: #{tpu_custom_call.1} parent=35 // pred_check
          %p1852 = pneg %p176
        $region78: #{tpu_custom_call.1} parent=35 // pred_check_branch
          %1854 = sbr.rel (%p1852) target = $region80
        $region79: #{tpu_custom_call.1} parent=35 // pred_region
          %1855 = dma.done [#allocation14], 128
        $region80: #{tpu_custom_call.1} parent=35 // pred_fallthru
          _
      $region36: #{tpu_custom_call.1} parent=5 // pred_fallthru
        _
      %p1856 = scmp.le.s32.totalorder 2, %s22
      // Predicated region
      $region81: #{tpu_custom_call.1} parent=5 // pred_check
        %p1857 = pneg %p1856
      $region82: #{tpu_custom_call.1} parent=5 // pred_check_branch
        %1859 = sbr.rel (%p1857) target = $region84
      $region83: #{tpu_custom_call.1} parent=5 // pred_region
        %s1860 = ssub.s32 %s22, 2
        // Predicated region
        $region85: #{tpu_custom_call.1} parent=83 // pred_check
          %p1861 = pneg %p140
        $region86: #{tpu_custom_call.1} parent=83 // pred_check_branch
          %1863 = sbr.rel (%p1861) target = $region88
        $region87: #{tpu_custom_call.1} parent=83 // pred_region
          %s1864 = sand.u32 %s125, 1
          %s1865 = scalar_lea.sflag [#allocation6], %s1864
          %s1866 = sand.u32 %s125, 1
          %s1867 = smul.addr %s1866, 64
          %s1868 = scalar_lea.vmem [#allocation12], %s1867
          %1869 = dma.done %s1865, 1024
        $region88: #{tpu_custom_call.1} parent=83 // pred_fallthru
          _
      $region84: #{tpu_custom_call.1} parent=5 // pred_fallthru
        _
    $region6: #{tpu_custom_call.1} parent=1 // loop_footer
      %s26 = sadd.s32 1, %s22
    $region7: #{tpu_custom_call.1} parent=1 // loop_footer_branch
      %21 = sbr.rel target = $region3
    $region8: #{tpu_custom_call.1} parent=1 // loop_exit
      _
    %1870 = vsyncpa [#allocation5], 1
    %s1871 = scalar_lea.sflag [#allocation5], 1
    %1872 = vsyncpa %s1871, 1
    %1873 = vsyncpa [#allocation8], 1
    %1874 = vsyncpa [#allocation11], 1
    %1875 = vsyncpa [#allocation6], 1
    %s1876 = scalar_lea.sflag [#allocation6], 1
    %1877 = vsyncpa %s1876, 1
    %1878 = vsyncpa [#allocation14], 1

</llo_original>
